<compile_context>
chip_gen: v7x
topology: tpu7x:2x2x1
jax: 0.10.0
libtpu: 0.0.40
codegen_flags: <defaults>
</compile_context>

<pallas_src>
import functools

import jax
import jax.numpy as jnp
from jax.experimental import pallas as pl
from jax.experimental.pallas import tpu as pltpu

NEG_SLOPE = 0.01   # F.leaky_relu default negative_slope
LANE = 128


def _round_up(x, m):
    return (x + m - 1) // m * m


def _cdiv(a, b):
    return -(-a // b)


def gat_attn_kernel(z_ref, s_ref, w_ref, out_ref, *, K):
    # z_ref:   (T, K*D)       per-edge features, lane-dense (edge k in lanes [k*D, (k+1)*D))
    # s_ref:   (T, K)         precomputed node-level logits: w_src.z_src[src] + w_dst.z_dst
    # w_ref:   (K*D, >=128)   block-diagonal copy of w_edge (columns >= K are zero padding)
    # out_ref: (T, K)         softmax-normalized attention per (dst, edge)

    # All K per-edge dot products with w_edge in one MXU contraction.  HIGHEST precision keeps
    # exact-f32 semantics; the MXU is otherwise idle, so this hides under the z-stream DMA.
    s_edge = jnp.dot(
        z_ref[...], w_ref[...],
        preferred_element_type=jnp.float32,
        precision=jax.lax.Precision.HIGHEST,
    )[:, :K]                                                    # (T, K)

    logits = s_edge + s_ref[...].astype(jnp.float32)            # (T, K)
    a = jnp.where(logits >= 0, logits, NEG_SLOPE * logits)      # leaky_relu

    # edge_softmax over the K incoming edges of each destination row.  Exact divide (not the
    # approx EUP reciprocal) so rows sum to 1 exactly; at 8 lanes the cost is negligible.
    m = jnp.max(a, axis=-1, keepdims=True)
    e = jnp.exp(a - m)
    out_ref[...] = (e / jnp.sum(e, axis=-1, keepdims=True)).astype(out_ref.dtype)


def gat_layer(z_src_nodes, z_dst_nodes, z_edge, src_idx, weight, *,
              tile_n=4096, min_grid_steps=4):
    """Pallas implementation of GATLayer.forward (dense K-regular edge packing).

    z_src_nodes: (N_src, D)     source-node features ('z_src'); f32 or bf16
    z_dst_nodes: (N_dst, D)     destination-node features ('z_t'); f32 or bf16
    z_edge:      (N_dst, K, D)  per-edge features ('z_c'); f32 or bf16
    src_idx:     (N_dst, K) i32 source-node index of each edge
    weight:      (1, 3*D)       additive_attn_fc.weight (PyTorch Linear layout)

    returns:     (N_dst*K, 1)   edge-softmaxed attention (DGL edge-tensor layout), f32
    """
    # TODO(synk): a general DGL block has ragged in-degree (CSR edge_softmax); this kernel
    # assumes every destination node has exactly K real incoming edges (no validity mask).
    N_dst, K, D = z_edge.shape
    KD = K * D

    # ---- wrapper glue (tiny: O(N*D) matvecs + O(N*K) scalar gather) -----------------------
    w3 = weight.reshape(3, D).astype(jnp.float32)
    w_src, w_dst, w_edge = w3[0], w3[1], w3[2]

    hi = jax.lax.Precision.HIGHEST
    s_src_node = jnp.einsum("nd,d->n", z_src_nodes.astype(jnp.float32), w_src, precision=hi)
    s_dst_node = jnp.einsum("nd,d->n", z_dst_nodes.astype(jnp.float32), w_dst, precision=hi)
    # NOTE: jnp.take clamps out-of-range indices (JAX semantics); malformed graphs not caught.
    s_nodes = jnp.take(s_src_node, src_idx, axis=0) + s_dst_node[:, None]        # (N_dst, K)

    z_flat = z_edge.reshape(N_dst, KD)            # lane-dense view of the dominant stream
    # Block-diagonal w_edge: column k holds w_edge in rows [k*D, (k+1)*D); pad columns up to a
    # full 128-lane MXU tile (padding columns are zero and sliced off in-kernel).
    w_blk = jnp.kron(jnp.eye(K, dtype=jnp.float32), w_edge.reshape(D, 1))        # (K*D, K)
    w_cols = _round_up(K, LANE)
    if w_cols != K:
        w_blk = jnp.pad(w_blk, ((0, 0), (0, w_cols - K)))
    w_blk = w_blk.astype(z_flat.dtype)

    # ---- tiling ----------------------------------------------------------------------------
    # Big dst tiles amortize the ~0.35us per-grid-step overhead, but cap the tile so large
    # graphs still produce >= min_grid_steps steps (keeps both v7x TensorCores busy via the
    # "parallel" grid axis); never shrink below 512 rows unless the graph itself is smaller.
    n8 = _round_up(N_dst, 8)
    cap = _round_up(_cdiv(N_dst, max(min_grid_steps, 1)), 8)
    tile = min(max(8, (tile_n // 8) * 8), max(512, cap), n8)

    n_pad = _round_up(N_dst, tile)
    if n_pad != N_dst:
        # padded rows produce a well-defined uniform softmax and are sliced off below
        z_flat = jnp.pad(z_flat, ((0, n_pad - N_dst), (0, 0)))
        s_nodes = jnp.pad(s_nodes, ((0, n_pad - N_dst), (0, 0)))

    # ---- VMEM budget from the actual (lane-padded, double-buffered) block sizes ------------
    def blk_bytes(rows, cols, itemsize):
        return rows * _round_up(cols, LANE) * itemsize          # rows are already 8-multiples

    z_item = jnp.dtype(z_flat.dtype).itemsize
    vmem_need = 2 * (blk_bytes(tile, KD, z_item)                # z stream (lane-dense)
                     + blk_bytes(tile, K, 4)                    # node logits (K -> 128 lanes)
                     + blk_bytes(tile, K, 4)                    # output    (K -> 128 lanes)
                     + blk_bytes(KD, w_cols, z_item))           # block-diagonal weight
    vmem_limit = min(int(vmem_need) + (4 << 20), 128 * 1024 * 1024)

    kernel = functools.partial(gat_attn_kernel, K=K)

    attn = pl.pallas_call(
        kernel,
        out_shape=jax.ShapeDtypeStruct((n_pad, K), jnp.float32),
        grid_spec=pltpu.PrefetchScalarGridSpec(
            num_scalar_prefetch=0,
            grid=(n_pad // tile,),
            in_specs=[
                pl.BlockSpec((tile, KD), lambda i: (i, 0)),       # z_edge, lane-dense
                pl.BlockSpec((tile, K), lambda i: (i, 0)),        # node-level logit scalars
                pl.BlockSpec((KD, w_cols), lambda i: (0, 0)),     # block-diagonal w_edge
            ],
            out_specs=pl.BlockSpec((tile, K), lambda i: (i, 0)),
        ),
        compiler_params=pltpu.CompilerParams(
            dimension_semantics=("parallel",),    # dst tiles independent -> megacore on v7x
            vmem_limit_bytes=vmem_limit,
        ),
    )(z_flat, s_nodes, w_blk)

    return attn[:N_dst].reshape(N_dst * K, 1)


def gat_layer_ref(z_src_nodes, z_dst_nodes, z_edge, src_idx, weight):
    """Pure-JAX reference (mirrors the PyTorch/DGL semantics)."""
    N_dst, K, D = z_edge.shape
    zsrc_e = jnp.take(z_src_nodes, src_idx, axis=0)                      # (N_dst, K, D)
    zt_e = jnp.broadcast_to(z_dst_nodes[:, None, :], (N_dst, K, D))      # (N_dst, K, D)
    x = jnp.concatenate([zsrc_e, zt_e, z_edge], axis=-1).astype(jnp.float32)
    logits = jnp.einsum("nkf,f->nk", x, weight.reshape(-1).astype(jnp.float32),
                        precision=jax.lax.Precision.HIGHEST)
    a = jnp.where(logits >= 0, logits, NEG_SLOPE * logits)
    a = a - jnp.max(a, axis=-1, keepdims=True)
    e = jnp.exp(a)
    sm = e / jnp.sum(e, axis=-1, keepdims=True)
    return sm.reshape(N_dst * K, 1)


if __name__ == "__main__":
    D = 32        # input_dims
    K = 8         # in-degree of every destination node
    N_DST = 200
    N_SRC = 48

    key = jax.random.PRNGKey(0)
    k1, k2, k3, k4, k5 = jax.random.split(key, 5)

    z_src_nodes = jax.random.normal(k1, (N_SRC, D), dtype=jnp.float32)
    z_dst_nodes = jax.random.normal(k2, (N_DST, D), dtype=jnp.float32)
    z_edge = jax.random.normal(k3, (N_DST, K, D), dtype=jnp.float32)
    src_idx = jax.random.randint(k4, (N_DST, K), 0, N_SRC, dtype=jnp.int32)

    # additive_attn_fc: nn.Linear(3*D, 1, bias=False), xavier_normal_ with gain('relu')=sqrt(2)
    gain = jnp.sqrt(2.0)
    std = gain * jnp.sqrt(2.0 / (3 * D + 1))
    weight = std * jax.random.normal(k5, (1, 3 * D), dtype=jnp.float32)

    ref = gat_layer_ref(z_src_nodes, z_dst_nodes, z_edge, src_idx, weight)

    # Exercise both the single-tile path and the multi-tile + row-padding path.
    for tn in (4096, 64):
        out = gat_layer(z_src_nodes, z_dst_nodes, z_edge, src_idx, weight, tile_n=tn)
        out = jax.block_until_ready(out)
        assert out.shape == (N_DST * K, 1)
        assert jnp.allclose(out, ref, atol=2e-3, rtol=2e-3), f"mismatch vs reference (tile_n={tn})"

    print("KERNEL_OK")
</pallas_src>

<mosaic_0001>
module attributes {stable_mosaic.version = 11 : i64} {
  func.func @gat_attn_kernel(%arg0: i32, %arg1: memref<200x256xf32, #tpu.memory_space<vmem>>, %arg2: memref<200x8xf32, #tpu.memory_space<vmem>>, %arg3: memref<256x128xf32, #tpu.memory_space<vmem>>, %arg4: memref<200x8xf32, #tpu.memory_space<vmem>>) attributes {dimension_semantics = [#tpu.dimension_semantics<parallel>], iteration_bounds = array<i64: 1>, scalar_prefetch = 0 : i64, scratch_operands = 0 : i64, tpu.core_type = #tpu.core_type<tc>, window_params = [{transform_indices = @transform_0, window_bounds = array<i64: 200, 256>}, {transform_indices = @transform_1, window_bounds = array<i64: 200, 8>}, {pipeline_mode = #tpu.pipeline_mode<synchronous>, transform_indices = @transform_2, window_bounds = array<i64: 256, 128>}, {transform_indices = @transform_3, window_bounds = array<i64: 200, 8>}]} {
    %c0 = arith.constant 0 : index
    %c0_0 = arith.constant 0 : index
    %0 = vector.load %arg1[%c0, %c0_0] : memref<200x256xf32, #tpu.memory_space<vmem>>, vector<200x256xf32>
    %c0_1 = arith.constant 0 : index
    %c0_2 = arith.constant 0 : index
    %1 = vector.load %arg3[%c0_1, %c0_2] : memref<256x128xf32, #tpu.memory_space<vmem>>, vector<256x128xf32>
    %cst = arith.constant dense<0.000000e+00> : vector<200x128xf32>
    %2 = tpu.matmul %0, %1, %cst {dimension_numbers = #tpu.dot_dimension_numbers<[1], [0], [0], [1], [0, 0, 1, 1], [], []>, precision = #tpu.contract_precision<fp32>} : vector<200x256xf32>, vector<256x128xf32>, vector<200x128xf32> -> vector<200x128xf32>
    %3 = vector.extract_strided_slice %2 {offsets = [0, 0], sizes = [200, 8], strides = [1, 1]} : vector<200x128xf32> to vector<200x8xf32>
    %c0_3 = arith.constant 0 : index
    %c0_4 = arith.constant 0 : index
    %4 = vector.load %arg2[%c0_3, %c0_4] : memref<200x8xf32, #tpu.memory_space<vmem>>, vector<200x8xf32>
    %5 = arith.addf %3, %4 : vector<200x8xf32>
    %cst_5 = arith.constant 0.000000e+00 : f32
    %6 = vector.broadcast %cst_5 : f32 to vector<200x8xf32>
    %7 = arith.cmpf oge, %5, %6 : vector<200x8xf32>
    %cst_6 = arith.constant 0.00999999977 : f32
    %8 = vector.broadcast %cst_6 : f32 to vector<200x8xf32>
    %9 = arith.mulf %8, %5 : vector<200x8xf32>
    %10 = arith.select %7, %5, %9 : vector<200x8xi1>, vector<200x8xf32>
    %cst_7 = arith.constant dense<0xFF800000> : vector<200xf32>
    %11 = vector.multi_reduction <maximumf>, %10, %cst_7 [1] : vector<200x8xf32> to vector<200xf32>
    %12 = vector.shape_cast %11 : vector<200xf32> to vector<200x1xf32>
    %13 = vector.broadcast %12 : vector<200x1xf32> to vector<200x8xf32>
    %14 = arith.subf %10, %13 : vector<200x8xf32>
    %15 = math.exp %14 : vector<200x8xf32>
    %cst_8 = arith.constant dense<0.000000e+00> : vector<200xf32>
    %16 = vector.multi_reduction <add>, %15, %cst_8 [1] : vector<200x8xf32> to vector<200xf32>
    %17 = vector.shape_cast %16 : vector<200xf32> to vector<200x1xf32>
    %18 = vector.broadcast %17 : vector<200x1xf32> to vector<200x8xf32>
    %19 = arith.divf %15, %18 : vector<200x8xf32>
    %c0_9 = arith.constant 0 : index
    %c0_10 = arith.constant 0 : index
    %20 = vector.load %arg4[%c0_9, %c0_10] : memref<200x8xf32, #tpu.memory_space<vmem>>, vector<200x8xf32>
    tpu.vector_store %arg4[%c0_9, %c0_10], %19 {strides = array<i32>} : memref<200x8xf32, #tpu.memory_space<vmem>>, vector<200x8xf32>,
    return
  }
  func.func @transform_0(%arg0: i32) -> (i32, i32) {
    %c0_i32 = arith.constant 0 : i32
    %c0_i32_0 = arith.constant 0 : i32
    return %arg0, %c0_i32 : i32, i32
  }
  func.func @transform_1(%arg0: i32) -> (i32, i32) {
    %c0_i32 = arith.constant 0 : i32
    %c0_i32_0 = arith.constant 0 : i32
    return %arg0, %c0_i32 : i32, i32
  }
  func.func @transform_2(%arg0: i32) -> (i32, i32) {
    %c0_i32 = arith.constant 0 : i32
    %c0_i32_0 = arith.constant 0 : i32
    %c0_i32_1 = arith.constant 0 : i32
    return %c0_i32, %c0_i32_0 : i32, i32
  }
  func.func @transform_3(%arg0: i32) -> (i32, i32) {
    %c0_i32 = arith.constant 0 : i32
    %c0_i32_0 = arith.constant 0 : i32
    return %arg0, %c0_i32 : i32, i32
  }
}

</mosaic_0001>

<llo_original>
// kernel: tpu_custom_call.1
$region0: #{tpu_custom_call.1}
  #allocation0 [shape = 'u32[]', space=smem, size = 0x4, offset = 0x4, fixed_abs, tag = 'smem constant byte address 0x4 - core index']
  #allocation1 [shape = 'u32[144,128]{1,0:T(1,128)}', space=vmem, size = 0x12000, scoped, tag = 'internal scratch']
  %s0 = inlined_call_operand.hbm [shape: f32[200,256], index: 0, kind: input, shape index: {}]
  %s1 = inlined_call_operand.vmem [shape: f32[200,8], index: 1, kind: input, shape index: {}]
  %s2 = inlined_call_operand.hbm [shape: f32[256,128], index: 2, kind: input, shape index: {}]
  %s3 = inlined_call_operand.vmem [shape: f32[200,8], index: 3, kind: output, shape index: {}]
  %s4 = sld [smem:[#allocation0]]
  $region30: #{tpu_custom_call.1} parent=0
    _
  %s6 = ssub.s32 1, %s4
  %s7 = scalar_select 0, %s6, %s4
  $region1: #{tpu_custom_call.1} parent=0
    #allocation2 [shape = 'u8[204800]{0}', space=vmem, size = 0x32000, scoped, tag = 'input window, operand 0, single buffered']
    #allocation3 [shape = 's32[1]{0}', space=sflag, size = 0x4, scoped, tag = 'scoped memory for tpu_custom_call.1']
    #allocation4 [shape = 'u8[131072]{0}', space=vmem, size = 0x20000, scoped, tag = 'input window, operand 2, single buffered']
    #allocation5 [shape = 's32[1]{0}', space=sflag, size = 0x4, scoped, tag = 'scoped memory for tpu_custom_call.1']
    %8 = vsyncpa [#allocation3], 0
    %9 = vsyncpa [#allocation5], 0
    // Predicated region
    $region2: #{tpu_custom_call.1} parent=1 // pred_check
      _
    $region3: #{tpu_custom_call.1} parent=1 // pred_check_branch
      %11 = sbr.rel (0) target = $region5
    $region4: #{tpu_custom_call.1} parent=1 // pred_region
      %s13 = ssub.s32 6400, 6400
      %14 = vsyncadd [#allocation3], %s13
      %s15 = sshll.u32 [#allocation2], 4
      %s16 = int_to_ptr.vmem [resolvable:$true] %s15
      %21 = dma.hbm_to_vmem [thread:$0]  %s0, 6400, %s16, [#allocation3], 256, 256, 16
    $region5: #{tpu_custom_call.1} parent=1 // pred_fallthru
      _
    // Predicated region
    $region6: #{tpu_custom_call.1} parent=1 // pred_check
      _
    $region7: #{tpu_custom_call.1} parent=1 // pred_check_branch
      %23 = sbr.rel (0) target = $region9
    $region8: #{tpu_custom_call.1} parent=1 // pred_region
      _
    $region9: #{tpu_custom_call.1} parent=1 // pred_fallthru
      _
    // Predicated region
    $region10: #{tpu_custom_call.1} parent=1 // pred_check
      _
    $region11: #{tpu_custom_call.1} parent=1 // pred_check_branch
      %25 = sbr.rel (0) target = $region13
    $region12: #{tpu_custom_call.1} parent=1 // pred_region
      %s27 = ssub.s32 4096, 4096
      %28 = vsyncadd [#allocation5], %s27
      %s29 = sshll.u32 [#allocation4], 4
      %s30 = int_to_ptr.vmem [resolvable:$true] %s29
      %35 = dma.hbm_to_vmem [thread:$0]  %s2, 4096, %s30, [#allocation5], 128, 128, 8
    $region13: #{tpu_custom_call.1} parent=1 // pred_fallthru
      _
    // Predicated region
    $region14: #{tpu_custom_call.1} parent=1 // pred_check
      _
    $region15: #{tpu_custom_call.1} parent=1 // pred_check_branch
      %37 = sbr.rel (0) target = $region17
    $region16: #{tpu_custom_call.1} parent=1 // pred_region
      %38 = dma.done [#allocation3], 6400
    $region17: #{tpu_custom_call.1} parent=1 // pred_fallthru
      _
    // Predicated region
    $region18: #{tpu_custom_call.1} parent=1 // pred_check
      _
    $region19: #{tpu_custom_call.1} parent=1 // pred_check_branch
      %40 = sbr.rel (0) target = $region21
    $region20: #{tpu_custom_call.1} parent=1 // pred_region
      %41 = dma.done [#allocation5], 4096
    $region21: #{tpu_custom_call.1} parent=1 // pred_fallthru
      _
    %v42 = vld [vmem:[#allocation2] sm:$0xff]
    %v43 = vld [vmem:[#allocation2 + $0x8] sm:$0xff]
    %v44 = vld [vmem:[#allocation2 + $0x10] sm:$0xff]
    %v45 = vld [vmem:[#allocation2 + $0x18] sm:$0xff]
    %v46 = vld [vmem:[#allocation2 + $0x20] sm:$0xff]
    %v47 = vld [vmem:[#allocation2 + $0x28] sm:$0xff]
    %v48 = vld [vmem:[#allocation2 + $0x30] sm:$0xff]
    %v49 = vld [vmem:[#allocation2 + $0x38] sm:$0xff]
    %v50 = vld [vmem:[#allocation2 + $0x40] sm:$0xff]
    %v51 = vld [vmem:[#allocation2 + $0x48] sm:$0xff]
    %v52 = vld [vmem:[#allocation2 + $0x50] sm:$0xff]
    %v53 = vld [vmem:[#allocation2 + $0x58] sm:$0xff]
    %v54 = vld [vmem:[#allocation2 + $0x60] sm:$0xff]
    %v55 = vld [vmem:[#allocation2 + $0x68] sm:$0xff]
    %v56 = vld [vmem:[#allocation2 + $0x70] sm:$0xff]
    %v57 = vld [vmem:[#allocation2 + $0x78] sm:$0xff]
    %v58 = vld [vmem:[#allocation2 + $0x80] sm:$0xff]
    %v59 = vld [vmem:[#allocation2 + $0x88] sm:$0xff]
    %v60 = vld [vmem:[#allocation2 + $0x90] sm:$0xff]
    %v61 = vld [vmem:[#allocation2 + $0x98] sm:$0xff]
    %v62 = vld [vmem:[#allocation2 + $0xa0] sm:$0xff]
    %v63 = vld [vmem:[#allocation2 + $0xa8] sm:$0xff]
    %v64 = vld [vmem:[#allocation2 + $0xb0] sm:$0xff]
    %v65 = vld [vmem:[#allocation2 + $0xb8] sm:$0xff]
    %v66 = vld [vmem:[#allocation2 + $0xc0] sm:$0xff]
    %v67 = vld [vmem:[#allocation2 + $0xc8] sm:$0xff]
    %v68 = vld [vmem:[#allocation2 + $0xd0] sm:$0xff]
    %v69 = vld [vmem:[#allocation2 + $0xd8] sm:$0xff]
    %v70 = vld [vmem:[#allocation2 + $0xe0] sm:$0xff]
    %v71 = vld [vmem:[#allocation2 + $0xe8] sm:$0xff]
    %v72 = vld [vmem:[#allocation2 + $0xf0] sm:$0xff]
    %v73 = vld [vmem:[#allocation2 + $0xf8] sm:$0xff]
    %v74 = vld [vmem:[#allocation2 + $0x100] sm:$0xff]
    %v75 = vld [vmem:[#allocation2 + $0x108] sm:$0xff]
    %v76 = vld [vmem:[#allocation2 + $0x110] sm:$0xff]
    %v77 = vld [vmem:[#allocation2 + $0x118] sm:$0xff]
    %v78 = vld [vmem:[#allocation2 + $0x120] sm:$0xff]
    %v79 = vld [vmem:[#allocation2 + $0x128] sm:$0xff]
    %v80 = vld [vmem:[#allocation2 + $0x130] sm:$0xff]
    %v81 = vld [vmem:[#allocation2 + $0x138] sm:$0xff]
    %v82 = vld [vmem:[#allocation2 + $0x140] sm:$0xff]
    %v83 = vld [vmem:[#allocation2 + $0x148] sm:$0xff]
    %v84 = vld [vmem:[#allocation2 + $0x150] sm:$0xff]
    %v85 = vld [vmem:[#allocation2 + $0x158] sm:$0xff]
    %v86 = vld [vmem:[#allocation2 + $0x160] sm:$0xff]
    %v87 = vld [vmem:[#allocation2 + $0x168] sm:$0xff]
    %v88 = vld [vmem:[#allocation2 + $0x170] sm:$0xff]
    %v89 = vld [vmem:[#allocation2 + $0x178] sm:$0xff]
    %v90 = vld [vmem:[#allocation2 + $0x180] sm:$0xff]
    %v91 = vld [vmem:[#allocation2 + $0x188] sm:$0xff]
    %v92 = vld [vmem:[#allocation4] sm:$0xff]
    %v93 = vld [vmem:[#allocation4 + $0x8] sm:$0xff]
    %v94 = vld [vmem:[#allocation4 + $0x10] sm:$0xff]
    %v95 = vld [vmem:[#allocation4 + $0x18] sm:$0xff]
    %v96 = vld [vmem:[#allocation4 + $0x20] sm:$0xff]
    %v97 = vld [vmem:[#allocation4 + $0x28] sm:$0xff]
    %v98 = vld [vmem:[#allocation4 + $0x30] sm:$0xff]
    %v99 = vld [vmem:[#allocation4 + $0x38] sm:$0xff]
    %v100 = vld [vmem:[#allocation4 + $0x40] sm:$0xff]
    %v101 = vld [vmem:[#allocation4 + $0x48] sm:$0xff]
    %v102 = vld [vmem:[#allocation4 + $0x50] sm:$0xff]
    %v103 = vld [vmem:[#allocation4 + $0x58] sm:$0xff]
    %v104 = vld [vmem:[#allocation4 + $0x60] sm:$0xff]
    %v105 = vld [vmem:[#allocation4 + $0x68] sm:$0xff]
    %v106 = vld [vmem:[#allocation4 + $0x70] sm:$0xff]
    %v107 = vld [vmem:[#allocation4 + $0x78] sm:$0xff]
    %v108 = vld [vmem:[#allocation4 + $0x80] sm:$0xff]
    %v109 = vld [vmem:[#allocation4 + $0x88] sm:$0xff]
    %v110 = vld [vmem:[#allocation4 + $0x90] sm:$0xff]
    %v111 = vld [vmem:[#allocation4 + $0x98] sm:$0xff]
    %v112 = vld [vmem:[#allocation4 + $0xa0] sm:$0xff]
    %v113 = vld [vmem:[#allocation4 + $0xa8] sm:$0xff]
    %v114 = vld [vmem:[#allocation4 + $0xb0] sm:$0xff]
    %v115 = vld [vmem:[#allocation4 + $0xb8] sm:$0xff]
    %v116 = vld [vmem:[#allocation4 + $0xc0] sm:$0xff]
    %v117 = vld [vmem:[#allocation4 + $0xc8] sm:$0xff]
    %v118 = vld [vmem:[#allocation4 + $0xd0] sm:$0xff]
    %v119 = vld [vmem:[#allocation4 + $0xd8] sm:$0xff]
    %v120 = vld [vmem:[#allocation4 + $0xe0] sm:$0xff]
    %v121 = vld [vmem:[#allocation4 + $0xe8] sm:$0xff]
    %v122 = vld [vmem:[#allocation4 + $0xf0] sm:$0xff]
    %v123 = vld [vmem:[#allocation4 + $0xf8] sm:$0xff]
    %124 = vmatprep.subr.mxu0 0.0
    %v125 = vand.u32 %v92, 4294901760
    %126 = vmatpush1.msra.mxu0 %v125
    %127 = vmatprep.subr.mxu0 0.0
    %v128 = vand.u32 %v93, 4294901760
    %129 = vmatpush1.msra.mxu0 %v128
    %130 = vmatprep.subr.mxu0 0.0
    %v131 = vand.u32 %v94, 4294901760
    %132 = vmatpush1.msra.mxu0 %v131
    %133 = vmatprep.subr.mxu0 0.0
    %v134 = vand.u32 %v95, 4294901760
    %135 = vmatpush1.msra.mxu0 %v134
    %136 = vmatprep.subr.mxu0 0.0
    %v137 = vand.u32 %v96, 4294901760
    %138 = vmatpush1.msra.mxu0 %v137
    %139 = vmatprep.subr.mxu0 0.0
    %v140 = vand.u32 %v97, 4294901760
    %141 = vmatpush1.msra.mxu0 %v140
    %142 = vmatprep.subr.mxu0 0.0
    %v143 = vand.u32 %v98, 4294901760
    %144 = vmatpush1.msra.mxu0 %v143
    %145 = vmatprep.subr.mxu0 0.0
    %v146 = vand.u32 %v99, 4294901760
    %147 = vmatpush1.msra.mxu0 %v146
    %148 = vmatprep.subr.mxu0 0.0
    %v149 = vand.u32 %v100, 4294901760
    %150 = vmatpush1.msra.mxu0 %v149
    %151 = vmatprep.subr.mxu0 0.0
    %v152 = vand.u32 %v101, 4294901760
    %153 = vmatpush1.msra.mxu0 %v152
    %154 = vmatprep.subr.mxu0 0.0
    %v155 = vand.u32 %v102, 4294901760
    %156 = vmatpush1.msra.mxu0 %v155
    %157 = vmatprep.subr.mxu0 0.0
    %v158 = vand.u32 %v103, 4294901760
    %159 = vmatpush1.msra.mxu0 %v158
    %160 = vmatprep.subr.mxu0 0.0
    %v161 = vand.u32 %v104, 4294901760
    %162 = vmatpush1.msra.mxu0 %v161
    %163 = vmatprep.subr.mxu0 0.0
    %v164 = vand.u32 %v105, 4294901760
    %165 = vmatpush1.msra.mxu0 %v164
    %166 = vmatprep.subr.mxu0 0.0
    %v167 = vand.u32 %v106, 4294901760
    %168 = vmatpush1.msra.mxu0 %v167
    %169 = vmatprep.subr.mxu0 0.0
    %v170 = vand.u32 %v107, 4294901760
    %171 = vmatpush1.msra.mxu0 %v170
    %172 = vmatprep.subr.mxu0 0.0
    %v173 = vand.u32 %v108, 4294901760
    %174 = vmatpush1.msra.mxu0 %v173
    %175 = vmatprep.subr.mxu0 0.0
    %v176 = vand.u32 %v109, 4294901760
    %177 = vmatpush1.msra.mxu0 %v176
    %178 = vmatprep.subr.mxu0 0.0
    %v179 = vand.u32 %v110, 4294901760
    %180 = vmatpush1.msra.mxu0 %v179
    %181 = vmatprep.subr.mxu0 0.0
    %v182 = vand.u32 %v111, 4294901760
    %183 = vmatpush1.msra.mxu0 %v182
    %184 = vmatprep.subr.mxu0 0.0
    %v185 = vand.u32 %v112, 4294901760
    %186 = vmatpush1.msra.mxu0 %v185
    %187 = vmatprep.subr.mxu0 0.0
    %v188 = vand.u32 %v113, 4294901760
    %189 = vmatpush1.msra.mxu0 %v188
    %190 = vmatprep.subr.mxu0 0.0
    %v191 = vand.u32 %v114, 4294901760
    %192 = vmatpush1.msra.mxu0 %v191
    %193 = vmatprep.subr.mxu0 0.0
    %v194 = vand.u32 %v115, 4294901760
    %195 = vmatpush1.msra.mxu0 %v194
    %196 = vmatprep.subr.mxu0 0.0
    %v197 = vand.u32 %v116, 4294901760
    %198 = vmatpush1.msra.mxu0 %v197
    %199 = vmatprep.subr.mxu0 0.0
    %v200 = vand.u32 %v117, 4294901760
    %201 = vmatpush1.msra.mxu0 %v200
    %202 = vmatprep.subr.mxu0 0.0
    %v203 = vand.u32 %v118, 4294901760
    %204 = vmatpush1.msra.mxu0 %v203
    %205 = vmatprep.subr.mxu0 0.0
    %v206 = vand.u32 %v119, 4294901760
    %207 = vmatpush1.msra.mxu0 %v206
    %208 = vmatprep.subr.mxu0 0.0
    %v209 = vand.u32 %v120, 4294901760
    %210 = vmatpush1.msra.mxu0 %v209
    %211 = vmatprep.subr.mxu0 0.0
    %v212 = vand.u32 %v121, 4294901760
    %213 = vmatpush1.msra.mxu0 %v212
    %214 = vmatprep.subr.mxu0 0.0
    %v215 = vand.u32 %v122, 4294901760
    %216 = vmatpush1.msra.mxu0 %v215
    %217 = vmatprep.subr.mxu0 0.0
    %v218 = vand.u32 %v123, 4294901760
    %219 = vmatpush1.msra.mxu0 %v218
    %v220 = vand.u32 %v43, 4294901760
    %v221 = vsub.f32 %v43, %v220
    %v222 = vand.u32 %v221, 4294901760
    %v223 = vsub.f32 %v221, %v222
    %v224 = vand.u32 %v223, 4294901760
    %225 = vmatprep.mubr.f32.mxu0 %v224
    %v226 = vand.u32 %v42, 4294901760
    %v227 = vsub.f32 %v42, %v226
    %v228 = vand.u32 %v227, 4294901760
    %v229 = vsub.f32 %v227, %v228
    %v230 = vand.u32 %v229, 4294901760
    %231 = vmatmul.mubr.f32.gmra.mrb[0].mxu0 %v230
    %v232 = vpop.f32.mrb[0].mxu0
    %v233 = vadd.f32 0.0, %v232
    %v234 = vpop.f32.mrb[0].mxu0
    %v235 = vand.u32 %v45, 4294901760
    %v236 = vsub.f32 %v45, %v235
    %v237 = vand.u32 %v236, 4294901760
    %v238 = vsub.f32 %v236, %v237
    %v239 = vand.u32 %v238, 4294901760
    %240 = vmatprep.mubr.f32.mxu0 %v239
    %v241 = vand.u32 %v44, 4294901760
    %v242 = vsub.f32 %v44, %v241
    %v243 = vand.u32 %v242, 4294901760
    %v244 = vsub.f32 %v242, %v243
    %v245 = vand.u32 %v244, 4294901760
    %246 = vmatmul.mubr.f32.gmra.mrb[0].mxu0 %v245
    %v247 = vpop.f32.mrb[0].mxu0
    %v248 = vadd.f32 0.0, %v247
    %v249 = vpop.f32.mrb[0].mxu0
    %v250 = vand.u32 %v47, 4294901760
    %v251 = vsub.f32 %v47, %v250
    %v252 = vand.u32 %v251, 4294901760
    %v253 = vsub.f32 %v251, %v252
    %v254 = vand.u32 %v253, 4294901760
    %255 = vmatprep.mubr.f32.mxu0 %v254
    %v256 = vand.u32 %v46, 4294901760
    %v257 = vsub.f32 %v46, %v256
    %v258 = vand.u32 %v257, 4294901760
    %v259 = vsub.f32 %v257, %v258
    %v260 = vand.u32 %v259, 4294901760
    %261 = vmatmul.mubr.f32.gmra.mrb[0].mxu0 %v260
    %v262 = vpop.f32.mrb[0].mxu0
    %v263 = vadd.f32 0.0, %v262
    %v264 = vpop.f32.mrb[0].mxu0
    %v265 = vand.u32 %v49, 4294901760
    %v266 = vsub.f32 %v49, %v265
    %v267 = vand.u32 %v266, 4294901760
    %v268 = vsub.f32 %v266, %v267
    %v269 = vand.u32 %v268, 4294901760
    %270 = vmatprep.mubr.f32.mxu0 %v269
    %v271 = vand.u32 %v48, 4294901760
    %v272 = vsub.f32 %v48, %v271
    %v273 = vand.u32 %v272, 4294901760
    %v274 = vsub.f32 %v272, %v273
    %v275 = vand.u32 %v274, 4294901760
    %276 = vmatmul.mubr.f32.gmra.mrb[0].mxu0 %v275
    %v277 = vpop.f32.mrb[0].mxu0
    %v278 = vadd.f32 0.0, %v277
    %v279 = vpop.f32.mrb[0].mxu0
    %v280 = vand.u32 %v51, 4294901760
    %v281 = vsub.f32 %v51, %v280
    %v282 = vand.u32 %v281, 4294901760
    %v283 = vsub.f32 %v281, %v282
    %v284 = vand.u32 %v283, 4294901760
    %285 = vmatprep.mubr.f32.mxu0 %v284
    %v286 = vand.u32 %v50, 4294901760
    %v287 = vsub.f32 %v50, %v286
    %v288 = vand.u32 %v287, 4294901760
    %v289 = vsub.f32 %v287, %v288
    %v290 = vand.u32 %v289, 4294901760
    %291 = vmatmul.mubr.f32.gmra.mrb[0].mxu0 %v290
    %v292 = vpop.f32.mrb[0].mxu0
    %v293 = vadd.f32 0.0, %v292
    %v294 = vpop.f32.mrb[0].mxu0
    %v295 = vand.u32 %v53, 4294901760
    %v296 = vsub.f32 %v53, %v295
    %v297 = vand.u32 %v296, 4294901760
    %v298 = vsub.f32 %v296, %v297
    %v299 = vand.u32 %v298, 4294901760
    %300 = vmatprep.mubr.f32.mxu0 %v299
    %v301 = vand.u32 %v52, 4294901760
    %v302 = vsub.f32 %v52, %v301
    %v303 = vand.u32 %v302, 4294901760
    %v304 = vsub.f32 %v302, %v303
    %v305 = vand.u32 %v304, 4294901760
    %306 = vmatmul.mubr.f32.gmra.mrb[0].mxu0 %v305
    %v307 = vpop.f32.mrb[0].mxu0
    %v308 = vadd.f32 0.0, %v307
    %v309 = vpop.f32.mrb[0].mxu0
    %v310 = vand.u32 %v55, 4294901760
    %v311 = vsub.f32 %v55, %v310
    %v312 = vand.u32 %v311, 4294901760
    %v313 = vsub.f32 %v311, %v312
    %v314 = vand.u32 %v313, 4294901760
    %315 = vmatprep.mubr.f32.mxu0 %v314
    %v316 = vand.u32 %v54, 4294901760
    %v317 = vsub.f32 %v54, %v316
    %v318 = vand.u32 %v317, 4294901760
    %v319 = vsub.f32 %v317, %v318
    %v320 = vand.u32 %v319, 4294901760
    %321 = vmatmul.mubr.f32.gmra.mrb[0].mxu0 %v320
    %v322 = vpop.f32.mrb[0].mxu0
    %v323 = vadd.f32 0.0, %v322
    %v324 = vpop.f32.mrb[0].mxu0
    %v325 = vand.u32 %v57, 4294901760
    %v326 = vsub.f32 %v57, %v325
    %v327 = vand.u32 %v326, 4294901760
    %v328 = vsub.f32 %v326, %v327
    %v329 = vand.u32 %v328, 4294901760
    %330 = vmatprep.mubr.f32.mxu0 %v329
    %v331 = vand.u32 %v56, 4294901760
    %v332 = vsub.f32 %v56, %v331
    %v333 = vand.u32 %v332, 4294901760
    %v334 = vsub.f32 %v332, %v333
    %v335 = vand.u32 %v334, 4294901760
    %336 = vmatmul.mubr.f32.gmra.mrb[0].mxu0 %v335
    %v337 = vpop.f32.mrb[0].mxu0
    %v338 = vadd.f32 0.0, %v337
    %v339 = vpop.f32.mrb[0].mxu0
    %v340 = vand.u32 %v59, 4294901760
    %v341 = vsub.f32 %v59, %v340
    %v342 = vand.u32 %v341, 4294901760
    %v343 = vsub.f32 %v341, %v342
    %v344 = vand.u32 %v343, 4294901760
    %345 = vmatprep.mubr.f32.mxu0 %v344
    %v346 = vand.u32 %v58, 4294901760
    %v347 = vsub.f32 %v58, %v346
    %v348 = vand.u32 %v347, 4294901760
    %v349 = vsub.f32 %v347, %v348
    %v350 = vand.u32 %v349, 4294901760
    %351 = vmatmul.mubr.f32.gmra.mrb[0].mxu0 %v350
    %v352 = vpop.f32.mrb[0].mxu0
    %v353 = vadd.f32 0.0, %v352
    %v354 = vpop.f32.mrb[0].mxu0
    %v355 = vand.u32 %v61, 4294901760
    %v356 = vsub.f32 %v61, %v355
    %v357 = vand.u32 %v356, 4294901760
    %v358 = vsub.f32 %v356, %v357
    %v359 = vand.u32 %v358, 4294901760
    %360 = vmatprep.mubr.f32.mxu0 %v359
    %v361 = vand.u32 %v60, 4294901760
    %v362 = vsub.f32 %v60, %v361
    %v363 = vand.u32 %v362, 4294901760
    %v364 = vsub.f32 %v362, %v363
    %v365 = vand.u32 %v364, 4294901760
    %366 = vmatmul.mubr.f32.gmra.mrb[0].mxu0 %v365
    %v367 = vpop.f32.mrb[0].mxu0
    %v368 = vadd.f32 0.0, %v367
    %v369 = vpop.f32.mrb[0].mxu0
    %v370 = vand.u32 %v63, 4294901760
    %v371 = vsub.f32 %v63, %v370
    %v372 = vand.u32 %v371, 4294901760
    %v373 = vsub.f32 %v371, %v372
    %v374 = vand.u32 %v373, 4294901760
    %375 = vmatprep.mubr.f32.mxu0 %v374
    %v376 = vand.u32 %v62, 4294901760
    %v377 = vsub.f32 %v62, %v376
    %v378 = vand.u32 %v377, 4294901760
    %v379 = vsub.f32 %v377, %v378
    %v380 = vand.u32 %v379, 4294901760
    %381 = vmatmul.mubr.f32.gmra.mrb[0].mxu0 %v380
    %v382 = vpop.f32.mrb[0].mxu0
    %v383 = vadd.f32 0.0, %v382
    %v384 = vpop.f32.mrb[0].mxu0
    %v385 = vand.u32 %v65, 4294901760
    %v386 = vsub.f32 %v65, %v385
    %v387 = vand.u32 %v386, 4294901760
    %v388 = vsub.f32 %v386, %v387
    %v389 = vand.u32 %v388, 4294901760
    %390 = vmatprep.mubr.f32.mxu0 %v389
    %v391 = vand.u32 %v64, 4294901760
    %v392 = vsub.f32 %v64, %v391
    %v393 = vand.u32 %v392, 4294901760
    %v394 = vsub.f32 %v392, %v393
    %v395 = vand.u32 %v394, 4294901760
    %396 = vmatmul.mubr.f32.gmra.mrb[0].mxu0 %v395
    %v397 = vpop.f32.mrb[0].mxu0
    %v398 = vadd.f32 0.0, %v397
    %v399 = vpop.f32.mrb[0].mxu0
    %v400 = vand.u32 %v67, 4294901760
    %v401 = vsub.f32 %v67, %v400
    %v402 = vand.u32 %v401, 4294901760
    %v403 = vsub.f32 %v401, %v402
    %v404 = vand.u32 %v403, 4294901760
    %405 = vmatprep.mubr.f32.mxu0 %v404
    %v406 = vand.u32 %v66, 4294901760
    %v407 = vsub.f32 %v66, %v406
    %v408 = vand.u32 %v407, 4294901760
    %v409 = vsub.f32 %v407, %v408
    %v410 = vand.u32 %v409, 4294901760
    %411 = vmatmul.mubr.f32.gmra.mrb[0].mxu0 %v410
    %v412 = vpop.f32.mrb[0].mxu0
    %v413 = vadd.f32 0.0, %v412
    %v414 = vpop.f32.mrb[0].mxu0
    %v415 = vand.u32 %v69, 4294901760
    %v416 = vsub.f32 %v69, %v415
    %v417 = vand.u32 %v416, 4294901760
    %v418 = vsub.f32 %v416, %v417
    %v419 = vand.u32 %v418, 4294901760
    %420 = vmatprep.mubr.f32.mxu0 %v419
    %v421 = vand.u32 %v68, 4294901760
    %v422 = vsub.f32 %v68, %v421
    %v423 = vand.u32 %v422, 4294901760
    %v424 = vsub.f32 %v422, %v423
    %v425 = vand.u32 %v424, 4294901760
    %426 = vmatmul.mubr.f32.gmra.mrb[0].mxu0 %v425
    %v427 = vpop.f32.mrb[0].mxu0
    %v428 = vadd.f32 0.0, %v427
    %v429 = vpop.f32.mrb[0].mxu0
    %v430 = vand.u32 %v71, 4294901760
    %v431 = vsub.f32 %v71, %v430
    %v432 = vand.u32 %v431, 4294901760
    %v433 = vsub.f32 %v431, %v432
    %v434 = vand.u32 %v433, 4294901760
    %435 = vmatprep.mubr.f32.mxu0 %v434
    %v436 = vand.u32 %v70, 4294901760
    %v437 = vsub.f32 %v70, %v436
    %v438 = vand.u32 %v437, 4294901760
    %v439 = vsub.f32 %v437, %v438
    %v440 = vand.u32 %v439, 4294901760
    %441 = vmatmul.mubr.f32.gmra.mrb[0].mxu0 %v440
    %v442 = vpop.f32.mrb[0].mxu0
    %v443 = vadd.f32 0.0, %v442
    %v444 = vpop.f32.mrb[0].mxu0
    %v445 = vand.u32 %v73, 4294901760
    %v446 = vsub.f32 %v73, %v445
    %v447 = vand.u32 %v446, 4294901760
    %v448 = vsub.f32 %v446, %v447
    %v449 = vand.u32 %v448, 4294901760
    %450 = vmatprep.mubr.f32.mxu0 %v449
    %v451 = vand.u32 %v72, 4294901760
    %v452 = vsub.f32 %v72, %v451
    %v453 = vand.u32 %v452, 4294901760
    %v454 = vsub.f32 %v452, %v453
    %v455 = vand.u32 %v454, 4294901760
    %456 = vmatmul.mubr.f32.gmra.mrb[0].mxu0 %v455
    %v457 = vpop.f32.mrb[0].mxu0
    %v458 = vadd.f32 0.0, %v457
    %v459 = vpop.f32.mrb[0].mxu0
    %v460 = vand.u32 %v75, 4294901760
    %v461 = vsub.f32 %v75, %v460
    %v462 = vand.u32 %v461, 4294901760
    %v463 = vsub.f32 %v461, %v462
    %v464 = vand.u32 %v463, 4294901760
    %465 = vmatprep.mubr.f32.mxu0 %v464
    %v466 = vand.u32 %v74, 4294901760
    %v467 = vsub.f32 %v74, %v466
    %v468 = vand.u32 %v467, 4294901760
    %v469 = vsub.f32 %v467, %v468
    %v470 = vand.u32 %v469, 4294901760
    %471 = vmatmul.mubr.f32.gmra.mrb[0].mxu0 %v470
    %v472 = vpop.f32.mrb[0].mxu0
    %v473 = vadd.f32 0.0, %v472
    %v474 = vpop.f32.mrb[0].mxu0
    %v475 = vand.u32 %v77, 4294901760
    %v476 = vsub.f32 %v77, %v475
    %v477 = vand.u32 %v476, 4294901760
    %v478 = vsub.f32 %v476, %v477
    %v479 = vand.u32 %v478, 4294901760
    %480 = vmatprep.mubr.f32.mxu0 %v479
    %v481 = vand.u32 %v76, 4294901760
    %v482 = vsub.f32 %v76, %v481
    %v483 = vand.u32 %v482, 4294901760
    %v484 = vsub.f32 %v482, %v483
    %v485 = vand.u32 %v484, 4294901760
    %486 = vmatmul.mubr.f32.gmra.mrb[0].mxu0 %v485
    %v487 = vpop.f32.mrb[0].mxu0
    %v488 = vadd.f32 0.0, %v487
    %v489 = vpop.f32.mrb[0].mxu0
    %v490 = vand.u32 %v79, 4294901760
    %v491 = vsub.f32 %v79, %v490
    %v492 = vand.u32 %v491, 4294901760
    %v493 = vsub.f32 %v491, %v492
    %v494 = vand.u32 %v493, 4294901760
    %495 = vmatprep.mubr.f32.mxu0 %v494
    %v496 = vand.u32 %v78, 4294901760
    %v497 = vsub.f32 %v78, %v496
    %v498 = vand.u32 %v497, 4294901760
    %v499 = vsub.f32 %v497, %v498
    %v500 = vand.u32 %v499, 4294901760
    %501 = vmatmul.mubr.f32.gmra.mrb[0].mxu0 %v500
    %v502 = vpop.f32.mrb[0].mxu0
    %v503 = vadd.f32 0.0, %v502
    %v504 = vpop.f32.mrb[0].mxu0
    %v505 = vand.u32 %v81, 4294901760
    %v506 = vsub.f32 %v81, %v505
    %v507 = vand.u32 %v506, 4294901760
    %v508 = vsub.f32 %v506, %v507
    %v509 = vand.u32 %v508, 4294901760
    %510 = vmatprep.mubr.f32.mxu0 %v509
    %v511 = vand.u32 %v80, 4294901760
    %v512 = vsub.f32 %v80, %v511
    %v513 = vand.u32 %v512, 4294901760
    %v514 = vsub.f32 %v512, %v513
    %v515 = vand.u32 %v514, 4294901760
    %516 = vmatmul.mubr.f32.gmra.mrb[0].mxu0 %v515
    %v517 = vpop.f32.mrb[0].mxu0
    %v518 = vadd.f32 0.0, %v517
    %v519 = vpop.f32.mrb[0].mxu0
    %v520 = vand.u32 %v83, 4294901760
    %v521 = vsub.f32 %v83, %v520
    %v522 = vand.u32 %v521, 4294901760
    %v523 = vsub.f32 %v521, %v522
    %v524 = vand.u32 %v523, 4294901760
    %525 = vmatprep.mubr.f32.mxu0 %v524
    %v526 = vand.u32 %v82, 4294901760
    %v527 = vsub.f32 %v82, %v526
    %v528 = vand.u32 %v527, 4294901760
    %v529 = vsub.f32 %v527, %v528
    %v530 = vand.u32 %v529, 4294901760
    %531 = vmatmul.mubr.f32.gmra.mrb[0].mxu0 %v530
    %v532 = vpop.f32.mrb[0].mxu0
    %v533 = vadd.f32 0.0, %v532
    %v534 = vpop.f32.mrb[0].mxu0
    %v535 = vand.u32 %v85, 4294901760
    %v536 = vsub.f32 %v85, %v535
    %v537 = vand.u32 %v536, 4294901760
    %v538 = vsub.f32 %v536, %v537
    %v539 = vand.u32 %v538, 4294901760
    %540 = vmatprep.mubr.f32.mxu0 %v539
    %v541 = vand.u32 %v84, 4294901760
    %v542 = vsub.f32 %v84, %v541
    %v543 = vand.u32 %v542, 4294901760
    %v544 = vsub.f32 %v542, %v543
    %v545 = vand.u32 %v544, 4294901760
    %546 = vmatmul.mubr.f32.gmra.mrb[0].mxu0 %v545
    %v547 = vpop.f32.mrb[0].mxu0
    %v548 = vadd.f32 0.0, %v547
    %v549 = vpop.f32.mrb[0].mxu0
    %v550 = vand.u32 %v87, 4294901760
    %v551 = vsub.f32 %v87, %v550
    %v552 = vand.u32 %v551, 4294901760
    %v553 = vsub.f32 %v551, %v552
    %v554 = vand.u32 %v553, 4294901760
    %555 = vmatprep.mubr.f32.mxu0 %v554
    %v556 = vand.u32 %v86, 4294901760
    %v557 = vsub.f32 %v86, %v556
    %v558 = vand.u32 %v557, 4294901760
    %v559 = vsub.f32 %v557, %v558
    %v560 = vand.u32 %v559, 4294901760
    %561 = vmatmul.mubr.f32.gmra.mrb[0].mxu0 %v560
    %v562 = vpop.f32.mrb[0].mxu0
    %v563 = vadd.f32 0.0, %v562
    %v564 = vpop.f32.mrb[0].mxu0
    %v565 = vand.u32 %v89, 4294901760
    %v566 = vsub.f32 %v89, %v565
    %v567 = vand.u32 %v566, 4294901760
    %v568 = vsub.f32 %v566, %v567
    %v569 = vand.u32 %v568, 4294901760
    %570 = vmatprep.mubr.f32.mxu0 %v569
    %v571 = vand.u32 %v88, 4294901760
    %v572 = vsub.f32 %v88, %v571
    %v573 = vand.u32 %v572, 4294901760
    %v574 = vsub.f32 %v572, %v573
    %v575 = vand.u32 %v574, 4294901760
    %576 = vmatmul.mubr.f32.gmra.mrb[0].mxu0 %v575
    %v577 = vpop.f32.mrb[0].mxu0
    %v578 = vadd.f32 0.0, %v577
    %v579 = vpop.f32.mrb[0].mxu0
    %v580 = vand.u32 %v91, 4294901760
    %v581 = vsub.f32 %v91, %v580
    %v582 = vand.u32 %v581, 4294901760
    %v583 = vsub.f32 %v581, %v582
    %v584 = vand.u32 %v583, 4294901760
    %585 = vmatprep.mubr.f32.mxu0 %v584
    %v586 = vand.u32 %v90, 4294901760
    %v587 = vsub.f32 %v90, %v586
    %v588 = vand.u32 %v587, 4294901760
    %v589 = vsub.f32 %v587, %v588
    %v590 = vand.u32 %v589, 4294901760
    %591 = vmatmul.mubr.f32.gmra.mrb[0].mxu0 %v590
    %v592 = vpop.f32.mrb[0].mxu0
    %v593 = vadd.f32 0.0, %v592
    %v594 = vpop.f32.mrb[0].mxu0
    %595 = vdwg.mxu0
    %596 = vmatprep.subr.mxu0 0.0
    %v597 = vand.u32 %v92, 4294901760
    %v598 = vsub.f32 %v92, %v597
    %v599 = vand.u32 %v598, 4294901760
    %v600 = vsub.f32 %v598, %v599
    %v601 = vand.u32 %v600, 4294901760
    %602 = vmatpush1.msra.mxu0 %v601
    %603 = vmatprep.subr.mxu0 0.0
    %v604 = vand.u32 %v93, 4294901760
    %v605 = vsub.f32 %v93, %v604
    %v606 = vand.u32 %v605, 4294901760
    %v607 = vsub.f32 %v605, %v606
    %v608 = vand.u32 %v607, 4294901760
    %609 = vmatpush1.msra.mxu0 %v608
    %610 = vmatprep.subr.mxu0 0.0
    %v611 = vand.u32 %v94, 4294901760
    %v612 = vsub.f32 %v94, %v611
    %v613 = vand.u32 %v612, 4294901760
    %v614 = vsub.f32 %v612, %v613
    %v615 = vand.u32 %v614, 4294901760
    %616 = vmatpush1.msra.mxu0 %v615
    %617 = vmatprep.subr.mxu0 0.0
    %v618 = vand.u32 %v95, 4294901760
    %v619 = vsub.f32 %v95, %v618
    %v620 = vand.u32 %v619, 4294901760
    %v621 = vsub.f32 %v619, %v620
    %v622 = vand.u32 %v621, 4294901760
    %623 = vmatpush1.msra.mxu0 %v622
    %624 = vmatprep.subr.mxu0 0.0
    %v625 = vand.u32 %v96, 4294901760
    %v626 = vsub.f32 %v96, %v625
    %v627 = vand.u32 %v626, 4294901760
    %v628 = vsub.f32 %v626, %v627
    %v629 = vand.u32 %v628, 4294901760
    %630 = vmatpush1.msra.mxu0 %v629
    %631 = vmatprep.subr.mxu0 0.0
    %v632 = vand.u32 %v97, 4294901760
    %v633 = vsub.f32 %v97, %v632
    %v634 = vand.u32 %v633, 4294901760
    %v635 = vsub.f32 %v633, %v634
    %v636 = vand.u32 %v635, 4294901760
    %637 = vmatpush1.msra.mxu0 %v636
    %638 = vmatprep.subr.mxu0 0.0
    %v639 = vand.u32 %v98, 4294901760
    %v640 = vsub.f32 %v98, %v639
    %v641 = vand.u32 %v640, 4294901760
    %v642 = vsub.f32 %v640, %v641
    %v643 = vand.u32 %v642, 4294901760
    %644 = vmatpush1.msra.mxu0 %v643
    %645 = vmatprep.subr.mxu0 0.0
    %v646 = vand.u32 %v99, 4294901760
    %v647 = vsub.f32 %v99, %v646
    %v648 = vand.u32 %v647, 4294901760
    %v649 = vsub.f32 %v647, %v648
    %v650 = vand.u32 %v649, 4294901760
    %651 = vmatpush1.msra.mxu0 %v650
    %652 = vmatprep.subr.mxu0 0.0
    %v653 = vand.u32 %v100, 4294901760
    %v654 = vsub.f32 %v100, %v653
    %v655 = vand.u32 %v654, 4294901760
    %v656 = vsub.f32 %v654, %v655
    %v657 = vand.u32 %v656, 4294901760
    %658 = vmatpush1.msra.mxu0 %v657
    %659 = vmatprep.subr.mxu0 0.0
    %v660 = vand.u32 %v101, 4294901760
    %v661 = vsub.f32 %v101, %v660
    %v662 = vand.u32 %v661, 4294901760
    %v663 = vsub.f32 %v661, %v662
    %v664 = vand.u32 %v663, 4294901760
    %665 = vmatpush1.msra.mxu0 %v664
    %666 = vmatprep.subr.mxu0 0.0
    %v667 = vand.u32 %v102, 4294901760
    %v668 = vsub.f32 %v102, %v667
    %v669 = vand.u32 %v668, 4294901760
    %v670 = vsub.f32 %v668, %v669
    %v671 = vand.u32 %v670, 4294901760
    %672 = vmatpush1.msra.mxu0 %v671
    %673 = vmatprep.subr.mxu0 0.0
    %v674 = vand.u32 %v103, 4294901760
    %v675 = vsub.f32 %v103, %v674
    %v676 = vand.u32 %v675, 4294901760
    %v677 = vsub.f32 %v675, %v676
    %v678 = vand.u32 %v677, 4294901760
    %679 = vmatpush1.msra.mxu0 %v678
    %680 = vmatprep.subr.mxu0 0.0
    %v681 = vand.u32 %v104, 4294901760
    %v682 = vsub.f32 %v104, %v681
    %v683 = vand.u32 %v682, 4294901760
    %v684 = vsub.f32 %v682, %v683
    %v685 = vand.u32 %v684, 4294901760
    %686 = vmatpush1.msra.mxu0 %v685
    %687 = vmatprep.subr.mxu0 0.0
    %v688 = vand.u32 %v105, 4294901760
    %v689 = vsub.f32 %v105, %v688
    %v690 = vand.u32 %v689, 4294901760
    %v691 = vsub.f32 %v689, %v690
    %v692 = vand.u32 %v691, 4294901760
    %693 = vmatpush1.msra.mxu0 %v692
    %694 = vmatprep.subr.mxu0 0.0
    %v695 = vand.u32 %v106, 4294901760
    %v696 = vsub.f32 %v106, %v695
    %v697 = vand.u32 %v696, 4294901760
    %v698 = vsub.f32 %v696, %v697
    %v699 = vand.u32 %v698, 4294901760
    %700 = vmatpush1.msra.mxu0 %v699
    %701 = vmatprep.subr.mxu0 0.0
    %v702 = vand.u32 %v107, 4294901760
    %v703 = vsub.f32 %v107, %v702
    %v704 = vand.u32 %v703, 4294901760
    %v705 = vsub.f32 %v703, %v704
    %v706 = vand.u32 %v705, 4294901760
    %707 = vmatpush1.msra.mxu0 %v706
    %708 = vmatprep.subr.mxu0 0.0
    %v709 = vand.u32 %v108, 4294901760
    %v710 = vsub.f32 %v108, %v709
    %v711 = vand.u32 %v710, 4294901760
    %v712 = vsub.f32 %v710, %v711
    %v713 = vand.u32 %v712, 4294901760
    %714 = vmatpush1.msra.mxu0 %v713
    %715 = vmatprep.subr.mxu0 0.0
    %v716 = vand.u32 %v109, 4294901760
    %v717 = vsub.f32 %v109, %v716
    %v718 = vand.u32 %v717, 4294901760
    %v719 = vsub.f32 %v717, %v718
    %v720 = vand.u32 %v719, 4294901760
    %721 = vmatpush1.msra.mxu0 %v720
    %722 = vmatprep.subr.mxu0 0.0
    %v723 = vand.u32 %v110, 4294901760
    %v724 = vsub.f32 %v110, %v723
    %v725 = vand.u32 %v724, 4294901760
    %v726 = vsub.f32 %v724, %v725
    %v727 = vand.u32 %v726, 4294901760
    %728 = vmatpush1.msra.mxu0 %v727
    %729 = vmatprep.subr.mxu0 0.0
    %v730 = vand.u32 %v111, 4294901760
    %v731 = vsub.f32 %v111, %v730
    %v732 = vand.u32 %v731, 4294901760
    %v733 = vsub.f32 %v731, %v732
    %v734 = vand.u32 %v733, 4294901760
    %735 = vmatpush1.msra.mxu0 %v734
    %736 = vmatprep.subr.mxu0 0.0
    %v737 = vand.u32 %v112, 4294901760
    %v738 = vsub.f32 %v112, %v737
    %v739 = vand.u32 %v738, 4294901760
    %v740 = vsub.f32 %v738, %v739
    %v741 = vand.u32 %v740, 4294901760
    %742 = vmatpush1.msra.mxu0 %v741
    %743 = vmatprep.subr.mxu0 0.0
    %v744 = vand.u32 %v113, 4294901760
    %v745 = vsub.f32 %v113, %v744
    %v746 = vand.u32 %v745, 4294901760
    %v747 = vsub.f32 %v745, %v746
    %v748 = vand.u32 %v747, 4294901760
    %749 = vmatpush1.msra.mxu0 %v748
    %750 = vmatprep.subr.mxu0 0.0
    %v751 = vand.u32 %v114, 4294901760
    %v752 = vsub.f32 %v114, %v751
    %v753 = vand.u32 %v752, 4294901760
    %v754 = vsub.f32 %v752, %v753
    %v755 = vand.u32 %v754, 4294901760
    %756 = vmatpush1.msra.mxu0 %v755
    %757 = vmatprep.subr.mxu0 0.0
    %v758 = vand.u32 %v115, 4294901760
    %v759 = vsub.f32 %v115, %v758
    %v760 = vand.u32 %v759, 4294901760
    %v761 = vsub.f32 %v759, %v760
    %v762 = vand.u32 %v761, 4294901760
    %763 = vmatpush1.msra.mxu0 %v762
    %764 = vmatprep.subr.mxu0 0.0
    %v765 = vand.u32 %v116, 4294901760
    %v766 = vsub.f32 %v116, %v765
    %v767 = vand.u32 %v766, 4294901760
    %v768 = vsub.f32 %v766, %v767
    %v769 = vand.u32 %v768, 4294901760
    %770 = vmatpush1.msra.mxu0 %v769
    %771 = vmatprep.subr.mxu0 0.0
    %v772 = vand.u32 %v117, 4294901760
    %v773 = vsub.f32 %v117, %v772
    %v774 = vand.u32 %v773, 4294901760
    %v775 = vsub.f32 %v773, %v774
    %v776 = vand.u32 %v775, 4294901760
    %777 = vmatpush1.msra.mxu0 %v776
    %778 = vmatprep.subr.mxu0 0.0
    %v779 = vand.u32 %v118, 4294901760
    %v780 = vsub.f32 %v118, %v779
    %v781 = vand.u32 %v780, 4294901760
    %v782 = vsub.f32 %v780, %v781
    %v783 = vand.u32 %v782, 4294901760
    %784 = vmatpush1.msra.mxu0 %v783
    %785 = vmatprep.subr.mxu0 0.0
    %v786 = vand.u32 %v119, 4294901760
    %v787 = vsub.f32 %v119, %v786
    %v788 = vand.u32 %v787, 4294901760
    %v789 = vsub.f32 %v787, %v788
    %v790 = vand.u32 %v789, 4294901760
    %791 = vmatpush1.msra.mxu0 %v790
    %792 = vmatprep.subr.mxu0 0.0
    %v793 = vand.u32 %v120, 4294901760
    %v794 = vsub.f32 %v120, %v793
    %v795 = vand.u32 %v794, 4294901760
    %v796 = vsub.f32 %v794, %v795
    %v797 = vand.u32 %v796, 4294901760
    %798 = vmatpush1.msra.mxu0 %v797
    %799 = vmatprep.subr.mxu0 0.0
    %v800 = vand.u32 %v121, 4294901760
    %v801 = vsub.f32 %v121, %v800
    %v802 = vand.u32 %v801, 4294901760
    %v803 = vsub.f32 %v801, %v802
    %v804 = vand.u32 %v803, 4294901760
    %805 = vmatpush1.msra.mxu0 %v804
    %806 = vmatprep.subr.mxu0 0.0
    %v807 = vand.u32 %v122, 4294901760
    %v808 = vsub.f32 %v122, %v807
    %v809 = vand.u32 %v808, 4294901760
    %v810 = vsub.f32 %v808, %v809
    %v811 = vand.u32 %v810, 4294901760
    %812 = vmatpush1.msra.mxu0 %v811
    %813 = vmatprep.subr.mxu0 0.0
    %v814 = vand.u32 %v123, 4294901760
    %v815 = vsub.f32 %v123, %v814
    %v816 = vand.u32 %v815, 4294901760
    %v817 = vsub.f32 %v815, %v816
    %v818 = vand.u32 %v817, 4294901760
    %819 = vmatpush1.msra.mxu0 %v818
    %v820 = vand.u32 %v43, 4294901760
    %821 = vmatprep.mubr.f32.mxu0 %v820
    %v822 = vand.u32 %v42, 4294901760
    %823 = vmatmul.mubr.f32.gmra.mrb[0].mxu0 %v822
    %v824 = vpop.f32.mrb[0].mxu0
    %v825 = vadd.f32 %v233, %v824
    %v826 = vpop.f32.mrb[0].mxu0
    %v827 = vand.u32 %v45, 4294901760
    %828 = vmatprep.mubr.f32.mxu0 %v827
    %v829 = vand.u32 %v44, 4294901760
    %830 = vmatmul.mubr.f32.gmra.mrb[0].mxu0 %v829
    %v831 = vpop.f32.mrb[0].mxu0
    %v832 = vadd.f32 %v248, %v831
    %v833 = vpop.f32.mrb[0].mxu0
    %v834 = vand.u32 %v47, 4294901760
    %835 = vmatprep.mubr.f32.mxu0 %v834
    %v836 = vand.u32 %v46, 4294901760
    %837 = vmatmul.mubr.f32.gmra.mrb[0].mxu0 %v836
    %v838 = vpop.f32.mrb[0].mxu0
    %v839 = vadd.f32 %v263, %v838
    %v840 = vpop.f32.mrb[0].mxu0
    %v841 = vand.u32 %v49, 4294901760
    %842 = vmatprep.mubr.f32.mxu0 %v841
    %v843 = vand.u32 %v48, 4294901760
    %844 = vmatmul.mubr.f32.gmra.mrb[0].mxu0 %v843
    %v845 = vpop.f32.mrb[0].mxu0
    %v846 = vadd.f32 %v278, %v845
    %v847 = vpop.f32.mrb[0].mxu0
    %v848 = vand.u32 %v51, 4294901760
    %849 = vmatprep.mubr.f32.mxu0 %v848
    %v850 = vand.u32 %v50, 4294901760
    %851 = vmatmul.mubr.f32.gmra.mrb[0].mxu0 %v850
    %v852 = vpop.f32.mrb[0].mxu0
    %v853 = vadd.f32 %v293, %v852
    %v854 = vpop.f32.mrb[0].mxu0
    %v855 = vand.u32 %v53, 4294901760
    %856 = vmatprep.mubr.f32.mxu0 %v855
    %v857 = vand.u32 %v52, 4294901760
    %858 = vmatmul.mubr.f32.gmra.mrb[0].mxu0 %v857
    %v859 = vpop.f32.mrb[0].mxu0
    %v860 = vadd.f32 %v308, %v859
    %v861 = vpop.f32.mrb[0].mxu0
    %v862 = vand.u32 %v55, 4294901760
    %863 = vmatprep.mubr.f32.mxu0 %v862
    %v864 = vand.u32 %v54, 4294901760
    %865 = vmatmul.mubr.f32.gmra.mrb[0].mxu0 %v864
    %v866 = vpop.f32.mrb[0].mxu0
    %v867 = vadd.f32 %v323, %v866
    %v868 = vpop.f32.mrb[0].mxu0
    %v869 = vand.u32 %v57, 4294901760
    %870 = vmatprep.mubr.f32.mxu0 %v869
    %v871 = vand.u32 %v56, 4294901760
    %872 = vmatmul.mubr.f32.gmra.mrb[0].mxu0 %v871
    %v873 = vpop.f32.mrb[0].mxu0
    %v874 = vadd.f32 %v338, %v873
    %v875 = vpop.f32.mrb[0].mxu0
    %v876 = vand.u32 %v59, 4294901760
    %877 = vmatprep.mubr.f32.mxu0 %v876
    %v878 = vand.u32 %v58, 4294901760
    %879 = vmatmul.mubr.f32.gmra.mrb[0].mxu0 %v878
    %v880 = vpop.f32.mrb[0].mxu0
    %v881 = vadd.f32 %v353, %v880
    %v882 = vpop.f32.mrb[0].mxu0
    %v883 = vand.u32 %v61, 4294901760
    %884 = vmatprep.mubr.f32.mxu0 %v883
    %v885 = vand.u32 %v60, 4294901760
    %886 = vmatmul.mubr.f32.gmra.mrb[0].mxu0 %v885
    %v887 = vpop.f32.mrb[0].mxu0
    %v888 = vadd.f32 %v368, %v887
    %v889 = vpop.f32.mrb[0].mxu0
    %v890 = vand.u32 %v63, 4294901760
    %891 = vmatprep.mubr.f32.mxu0 %v890
    %v892 = vand.u32 %v62, 4294901760
    %893 = vmatmul.mubr.f32.gmra.mrb[0].mxu0 %v892
    %v894 = vpop.f32.mrb[0].mxu0
    %v895 = vadd.f32 %v383, %v894
    %v896 = vpop.f32.mrb[0].mxu0
    %v897 = vand.u32 %v65, 4294901760
    %898 = vmatprep.mubr.f32.mxu0 %v897
    %v899 = vand.u32 %v64, 4294901760
    %900 = vmatmul.mubr.f32.gmra.mrb[0].mxu0 %v899
    %v901 = vpop.f32.mrb[0].mxu0
    %v902 = vadd.f32 %v398, %v901
    %v903 = vpop.f32.mrb[0].mxu0
    %v904 = vand.u32 %v67, 4294901760
    %905 = vmatprep.mubr.f32.mxu0 %v904
    %v906 = vand.u32 %v66, 4294901760
    %907 = vmatmul.mubr.f32.gmra.mrb[0].mxu0 %v906
    %v908 = vpop.f32.mrb[0].mxu0
    %v909 = vadd.f32 %v413, %v908
    %v910 = vpop.f32.mrb[0].mxu0
    %v911 = vand.u32 %v69, 4294901760
    %912 = vmatprep.mubr.f32.mxu0 %v911
    %v913 = vand.u32 %v68, 4294901760
    %914 = vmatmul.mubr.f32.gmra.mrb[0].mxu0 %v913
    %v915 = vpop.f32.mrb[0].mxu0
    %v916 = vadd.f32 %v428, %v915
    %v917 = vpop.f32.mrb[0].mxu0
    %v918 = vand.u32 %v71, 4294901760
    %919 = vmatprep.mubr.f32.mxu0 %v918
    %v920 = vand.u32 %v70, 4294901760
    %921 = vmatmul.mubr.f32.gmra.mrb[0].mxu0 %v920
    %v922 = vpop.f32.mrb[0].mxu0
    %v923 = vadd.f32 %v443, %v922
    %v924 = vpop.f32.mrb[0].mxu0
    %v925 = vand.u32 %v73, 4294901760
    %926 = vmatprep.mubr.f32.mxu0 %v925
    %v927 = vand.u32 %v72, 4294901760
    %928 = vmatmul.mubr.f32.gmra.mrb[0].mxu0 %v927
    %v929 = vpop.f32.mrb[0].mxu0
    %v930 = vadd.f32 %v458, %v929
    %v931 = vpop.f32.mrb[0].mxu0
    %v932 = vand.u32 %v75, 4294901760
    %933 = vmatprep.mubr.f32.mxu0 %v932
    %v934 = vand.u32 %v74, 4294901760
    %935 = vmatmul.mubr.f32.gmra.mrb[0].mxu0 %v934
    %v936 = vpop.f32.mrb[0].mxu0
    %v937 = vadd.f32 %v473, %v936
    %v938 = vpop.f32.mrb[0].mxu0
    %v939 = vand.u32 %v77, 4294901760
    %940 = vmatprep.mubr.f32.mxu0 %v939
    %v941 = vand.u32 %v76, 4294901760
    %942 = vmatmul.mubr.f32.gmra.mrb[0].mxu0 %v941
    %v943 = vpop.f32.mrb[0].mxu0
    %v944 = vadd.f32 %v488, %v943
    %v945 = vpop.f32.mrb[0].mxu0
    %v946 = vand.u32 %v79, 4294901760
    %947 = vmatprep.mubr.f32.mxu0 %v946
    %v948 = vand.u32 %v78, 4294901760
    %949 = vmatmul.mubr.f32.gmra.mrb[0].mxu0 %v948
    %v950 = vpop.f32.mrb[0].mxu0
    %v951 = vadd.f32 %v503, %v950
    %v952 = vpop.f32.mrb[0].mxu0
    %v953 = vand.u32 %v81, 4294901760
    %954 = vmatprep.mubr.f32.mxu0 %v953
    %v955 = vand.u32 %v80, 4294901760
    %956 = vmatmul.mubr.f32.gmra.mrb[0].mxu0 %v955
    %v957 = vpop.f32.mrb[0].mxu0
    %v958 = vadd.f32 %v518, %v957
    %v959 = vpop.f32.mrb[0].mxu0
    %v960 = vand.u32 %v83, 4294901760
    %961 = vmatprep.mubr.f32.mxu0 %v960
    %v962 = vand.u32 %v82, 4294901760
    %963 = vmatmul.mubr.f32.gmra.mrb[0].mxu0 %v962
    %v964 = vpop.f32.mrb[0].mxu0
    %v965 = vadd.f32 %v533, %v964
    %v966 = vpop.f32.mrb[0].mxu0
    %v967 = vand.u32 %v85, 4294901760
    %968 = vmatprep.mubr.f32.mxu0 %v967
    %v969 = vand.u32 %v84, 4294901760
    %970 = vmatmul.mubr.f32.gmra.mrb[0].mxu0 %v969
    %v971 = vpop.f32.mrb[0].mxu0
    %v972 = vadd.f32 %v548, %v971
    %v973 = vpop.f32.mrb[0].mxu0
    %v974 = vand.u32 %v87, 4294901760
    %975 = vmatprep.mubr.f32.mxu0 %v974
    %v976 = vand.u32 %v86, 4294901760
    %977 = vmatmul.mubr.f32.gmra.mrb[0].mxu0 %v976
    %v978 = vpop.f32.mrb[0].mxu0
    %v979 = vadd.f32 %v563, %v978
    %v980 = vpop.f32.mrb[0].mxu0
    %v981 = vand.u32 %v89, 4294901760
    %982 = vmatprep.mubr.f32.mxu0 %v981
    %v983 = vand.u32 %v88, 4294901760
    %984 = vmatmul.mubr.f32.gmra.mrb[0].mxu0 %v983
    %v985 = vpop.f32.mrb[0].mxu0
    %v986 = vadd.f32 %v578, %v985
    %v987 = vpop.f32.mrb[0].mxu0
    %v988 = vand.u32 %v91, 4294901760
    %989 = vmatprep.mubr.f32.mxu0 %v988
    %v990 = vand.u32 %v90, 4294901760
    %991 = vmatmul.mubr.f32.gmra.mrb[0].mxu0 %v990
    %v992 = vpop.f32.mrb[0].mxu0
    %v993 = vadd.f32 %v593, %v992
    %v994 = vpop.f32.mrb[0].mxu0
    %995 = vdwg.mxu0
    %996 = vmatprep.subr.mxu0 0.0
    %v997 = vand.u32 %v92, 4294901760
    %v998 = vsub.f32 %v92, %v997
    %999 = vmatpush1.msra.mxu0 %v998
    %1000 = vmatprep.subr.mxu0 0.0
    %v1001 = vand.u32 %v93, 4294901760
    %v1002 = vsub.f32 %v93, %v1001
    %1003 = vmatpush1.msra.mxu0 %v1002
    %1004 = vmatprep.subr.mxu0 0.0
    %v1005 = vand.u32 %v94, 4294901760
    %v1006 = vsub.f32 %v94, %v1005
    %1007 = vmatpush1.msra.mxu0 %v1006
    %1008 = vmatprep.subr.mxu0 0.0
    %v1009 = vand.u32 %v95, 4294901760
    %v1010 = vsub.f32 %v95, %v1009
    %1011 = vmatpush1.msra.mxu0 %v1010
    %1012 = vmatprep.subr.mxu0 0.0
    %v1013 = vand.u32 %v96, 4294901760
    %v1014 = vsub.f32 %v96, %v1013
    %1015 = vmatpush1.msra.mxu0 %v1014
    %1016 = vmatprep.subr.mxu0 0.0
    %v1017 = vand.u32 %v97, 4294901760
    %v1018 = vsub.f32 %v97, %v1017
    %1019 = vmatpush1.msra.mxu0 %v1018
    %1020 = vmatprep.subr.mxu0 0.0
    %v1021 = vand.u32 %v98, 4294901760
    %v1022 = vsub.f32 %v98, %v1021
    %1023 = vmatpush1.msra.mxu0 %v1022
    %1024 = vmatprep.subr.mxu0 0.0
    %v1025 = vand.u32 %v99, 4294901760
    %v1026 = vsub.f32 %v99, %v1025
    %1027 = vmatpush1.msra.mxu0 %v1026
    %1028 = vmatprep.subr.mxu0 0.0
    %v1029 = vand.u32 %v100, 4294901760
    %v1030 = vsub.f32 %v100, %v1029
    %1031 = vmatpush1.msra.mxu0 %v1030
    %1032 = vmatprep.subr.mxu0 0.0
    %v1033 = vand.u32 %v101, 4294901760
    %v1034 = vsub.f32 %v101, %v1033
    %1035 = vmatpush1.msra.mxu0 %v1034
    %1036 = vmatprep.subr.mxu0 0.0
    %v1037 = vand.u32 %v102, 4294901760
    %v1038 = vsub.f32 %v102, %v1037
    %1039 = vmatpush1.msra.mxu0 %v1038
    %1040 = vmatprep.subr.mxu0 0.0
    %v1041 = vand.u32 %v103, 4294901760
    %v1042 = vsub.f32 %v103, %v1041
    %1043 = vmatpush1.msra.mxu0 %v1042
    %1044 = vmatprep.subr.mxu0 0.0
    %v1045 = vand.u32 %v104, 4294901760
    %v1046 = vsub.f32 %v104, %v1045
    %1047 = vmatpush1.msra.mxu0 %v1046
    %1048 = vmatprep.subr.mxu0 0.0
    %v1049 = vand.u32 %v105, 4294901760
    %v1050 = vsub.f32 %v105, %v1049
    %1051 = vmatpush1.msra.mxu0 %v1050
    %1052 = vmatprep.subr.mxu0 0.0
    %v1053 = vand.u32 %v106, 4294901760
    %v1054 = vsub.f32 %v106, %v1053
    %1055 = vmatpush1.msra.mxu0 %v1054
    %1056 = vmatprep.subr.mxu0 0.0
    %v1057 = vand.u32 %v107, 4294901760
    %v1058 = vsub.f32 %v107, %v1057
    %1059 = vmatpush1.msra.mxu0 %v1058
    %1060 = vmatprep.subr.mxu0 0.0
    %v1061 = vand.u32 %v108, 4294901760
    %v1062 = vsub.f32 %v108, %v1061
    %1063 = vmatpush1.msra.mxu0 %v1062
    %1064 = vmatprep.subr.mxu0 0.0
    %v1065 = vand.u32 %v109, 4294901760
    %v1066 = vsub.f32 %v109, %v1065
    %1067 = vmatpush1.msra.mxu0 %v1066
    %1068 = vmatprep.subr.mxu0 0.0
    %v1069 = vand.u32 %v110, 4294901760
    %v1070 = vsub.f32 %v110, %v1069
    %1071 = vmatpush1.msra.mxu0 %v1070
    %1072 = vmatprep.subr.mxu0 0.0
    %v1073 = vand.u32 %v111, 4294901760
    %v1074 = vsub.f32 %v111, %v1073
    %1075 = vmatpush1.msra.mxu0 %v1074
    %1076 = vmatprep.subr.mxu0 0.0
    %v1077 = vand.u32 %v112, 4294901760
    %v1078 = vsub.f32 %v112, %v1077
    %1079 = vmatpush1.msra.mxu0 %v1078
    %1080 = vmatprep.subr.mxu0 0.0
    %v1081 = vand.u32 %v113, 4294901760
    %v1082 = vsub.f32 %v113, %v1081
    %1083 = vmatpush1.msra.mxu0 %v1082
    %1084 = vmatprep.subr.mxu0 0.0
    %v1085 = vand.u32 %v114, 4294901760
    %v1086 = vsub.f32 %v114, %v1085
    %1087 = vmatpush1.msra.mxu0 %v1086
    %1088 = vmatprep.subr.mxu0 0.0
    %v1089 = vand.u32 %v115, 4294901760
    %v1090 = vsub.f32 %v115, %v1089
    %1091 = vmatpush1.msra.mxu0 %v1090
    %1092 = vmatprep.subr.mxu0 0.0
    %v1093 = vand.u32 %v116, 4294901760
    %v1094 = vsub.f32 %v116, %v1093
    %1095 = vmatpush1.msra.mxu0 %v1094
    %1096 = vmatprep.subr.mxu0 0.0
    %v1097 = vand.u32 %v117, 4294901760
    %v1098 = vsub.f32 %v117, %v1097
    %1099 = vmatpush1.msra.mxu0 %v1098
    %1100 = vmatprep.subr.mxu0 0.0
    %v1101 = vand.u32 %v118, 4294901760
    %v1102 = vsub.f32 %v118, %v1101
    %1103 = vmatpush1.msra.mxu0 %v1102
    %1104 = vmatprep.subr.mxu0 0.0
    %v1105 = vand.u32 %v119, 4294901760
    %v1106 = vsub.f32 %v119, %v1105
    %1107 = vmatpush1.msra.mxu0 %v1106
    %1108 = vmatprep.subr.mxu0 0.0
    %v1109 = vand.u32 %v120, 4294901760
    %v1110 = vsub.f32 %v120, %v1109
    %1111 = vmatpush1.msra.mxu0 %v1110
    %1112 = vmatprep.subr.mxu0 0.0
    %v1113 = vand.u32 %v121, 4294901760
    %v1114 = vsub.f32 %v121, %v1113
    %1115 = vmatpush1.msra.mxu0 %v1114
    %1116 = vmatprep.subr.mxu0 0.0
    %v1117 = vand.u32 %v122, 4294901760
    %v1118 = vsub.f32 %v122, %v1117
    %1119 = vmatpush1.msra.mxu0 %v1118
    %1120 = vmatprep.subr.mxu0 0.0
    %v1121 = vand.u32 %v123, 4294901760
    %v1122 = vsub.f32 %v123, %v1121
    %1123 = vmatpush1.msra.mxu0 %v1122
    %v1124 = vand.u32 %v43, 4294901760
    %v1125 = vsub.f32 %v43, %v1124
    %1126 = vmatprep.mubr.f32.mxu0 %v1125
    %v1127 = vand.u32 %v42, 4294901760
    %v1128 = vsub.f32 %v42, %v1127
    %1129 = vmatmul.mubr.f32.gmra.mrb[0].mxu0 %v1128
    %v1130 = vpop.f32.mrb[0].mxu0
    %v1131 = vadd.f32 %v825, %v1130
    %v1132 = vpop.f32.mrb[0].mxu0
    %v1133 = vand.u32 %v45, 4294901760
    %v1134 = vsub.f32 %v45, %v1133
    %1135 = vmatprep.mubr.f32.mxu0 %v1134
    %v1136 = vand.u32 %v44, 4294901760
    %v1137 = vsub.f32 %v44, %v1136
    %1138 = vmatmul.mubr.f32.gmra.mrb[0].mxu0 %v1137
    %v1139 = vpop.f32.mrb[0].mxu0
    %v1140 = vadd.f32 %v832, %v1139
    %v1141 = vpop.f32.mrb[0].mxu0
    %v1142 = vand.u32 %v47, 4294901760
    %v1143 = vsub.f32 %v47, %v1142
    %1144 = vmatprep.mubr.f32.mxu0 %v1143
    %v1145 = vand.u32 %v46, 4294901760
    %v1146 = vsub.f32 %v46, %v1145
    %1147 = vmatmul.mubr.f32.gmra.mrb[0].mxu0 %v1146
    %v1148 = vpop.f32.mrb[0].mxu0
    %v1149 = vadd.f32 %v839, %v1148
    %v1150 = vpop.f32.mrb[0].mxu0
    %v1151 = vand.u32 %v49, 4294901760
    %v1152 = vsub.f32 %v49, %v1151
    %1153 = vmatprep.mubr.f32.mxu0 %v1152
    %v1154 = vand.u32 %v48, 4294901760
    %v1155 = vsub.f32 %v48, %v1154
    %1156 = vmatmul.mubr.f32.gmra.mrb[0].mxu0 %v1155
    %v1157 = vpop.f32.mrb[0].mxu0
    %v1158 = vadd.f32 %v846, %v1157
    %v1159 = vpop.f32.mrb[0].mxu0
    %v1160 = vand.u32 %v51, 4294901760
    %v1161 = vsub.f32 %v51, %v1160
    %1162 = vmatprep.mubr.f32.mxu0 %v1161
    %v1163 = vand.u32 %v50, 4294901760
    %v1164 = vsub.f32 %v50, %v1163
    %1165 = vmatmul.mubr.f32.gmra.mrb[0].mxu0 %v1164
    %v1166 = vpop.f32.mrb[0].mxu0
    %v1167 = vadd.f32 %v853, %v1166
    %v1168 = vpop.f32.mrb[0].mxu0
    %v1169 = vand.u32 %v53, 4294901760
    %v1170 = vsub.f32 %v53, %v1169
    %1171 = vmatprep.mubr.f32.mxu0 %v1170
    %v1172 = vand.u32 %v52, 4294901760
    %v1173 = vsub.f32 %v52, %v1172
    %1174 = vmatmul.mubr.f32.gmra.mrb[0].mxu0 %v1173
    %v1175 = vpop.f32.mrb[0].mxu0
    %v1176 = vadd.f32 %v860, %v1175
    %v1177 = vpop.f32.mrb[0].mxu0
    %v1178 = vand.u32 %v55, 4294901760
    %v1179 = vsub.f32 %v55, %v1178
    %1180 = vmatprep.mubr.f32.mxu0 %v1179
    %v1181 = vand.u32 %v54, 4294901760
    %v1182 = vsub.f32 %v54, %v1181
    %1183 = vmatmul.mubr.f32.gmra.mrb[0].mxu0 %v1182
    %v1184 = vpop.f32.mrb[0].mxu0
    %v1185 = vadd.f32 %v867, %v1184
    %v1186 = vpop.f32.mrb[0].mxu0
    %v1187 = vand.u32 %v57, 4294901760
    %v1188 = vsub.f32 %v57, %v1187
    %1189 = vmatprep.mubr.f32.mxu0 %v1188
    %v1190 = vand.u32 %v56, 4294901760
    %v1191 = vsub.f32 %v56, %v1190
    %1192 = vmatmul.mubr.f32.gmra.mrb[0].mxu0 %v1191
    %v1193 = vpop.f32.mrb[0].mxu0
    %v1194 = vadd.f32 %v874, %v1193
    %v1195 = vpop.f32.mrb[0].mxu0
    %v1196 = vand.u32 %v59, 4294901760
    %v1197 = vsub.f32 %v59, %v1196
    %1198 = vmatprep.mubr.f32.mxu0 %v1197
    %v1199 = vand.u32 %v58, 4294901760
    %v1200 = vsub.f32 %v58, %v1199
    %1201 = vmatmul.mubr.f32.gmra.mrb[0].mxu0 %v1200
    %v1202 = vpop.f32.mrb[0].mxu0
    %v1203 = vadd.f32 %v881, %v1202
    %v1204 = vpop.f32.mrb[0].mxu0
    %v1205 = vand.u32 %v61, 4294901760
    %v1206 = vsub.f32 %v61, %v1205
    %1207 = vmatprep.mubr.f32.mxu0 %v1206
    %v1208 = vand.u32 %v60, 4294901760
    %v1209 = vsub.f32 %v60, %v1208
    %1210 = vmatmul.mubr.f32.gmra.mrb[0].mxu0 %v1209
    %v1211 = vpop.f32.mrb[0].mxu0
    %v1212 = vadd.f32 %v888, %v1211
    %v1213 = vpop.f32.mrb[0].mxu0
    %v1214 = vand.u32 %v63, 4294901760
    %v1215 = vsub.f32 %v63, %v1214
    %1216 = vmatprep.mubr.f32.mxu0 %v1215
    %v1217 = vand.u32 %v62, 4294901760
    %v1218 = vsub.f32 %v62, %v1217
    %1219 = vmatmul.mubr.f32.gmra.mrb[0].mxu0 %v1218
    %v1220 = vpop.f32.mrb[0].mxu0
    %v1221 = vadd.f32 %v895, %v1220
    %v1222 = vpop.f32.mrb[0].mxu0
    %v1223 = vand.u32 %v65, 4294901760
    %v1224 = vsub.f32 %v65, %v1223
    %1225 = vmatprep.mubr.f32.mxu0 %v1224
    %v1226 = vand.u32 %v64, 4294901760
    %v1227 = vsub.f32 %v64, %v1226
    %1228 = vmatmul.mubr.f32.gmra.mrb[0].mxu0 %v1227
    %v1229 = vpop.f32.mrb[0].mxu0
    %v1230 = vadd.f32 %v902, %v1229
    %v1231 = vpop.f32.mrb[0].mxu0
    %v1232 = vand.u32 %v67, 4294901760
    %v1233 = vsub.f32 %v67, %v1232
    %1234 = vmatprep.mubr.f32.mxu0 %v1233
    %v1235 = vand.u32 %v66, 4294901760
    %v1236 = vsub.f32 %v66, %v1235
    %1237 = vmatmul.mubr.f32.gmra.mrb[0].mxu0 %v1236
    %v1238 = vpop.f32.mrb[0].mxu0
    %v1239 = vadd.f32 %v909, %v1238
    %v1240 = vpop.f32.mrb[0].mxu0
    %v1241 = vand.u32 %v69, 4294901760
    %v1242 = vsub.f32 %v69, %v1241
    %1243 = vmatprep.mubr.f32.mxu0 %v1242
    %v1244 = vand.u32 %v68, 4294901760
    %v1245 = vsub.f32 %v68, %v1244
    %1246 = vmatmul.mubr.f32.gmra.mrb[0].mxu0 %v1245
    %v1247 = vpop.f32.mrb[0].mxu0
    %v1248 = vadd.f32 %v916, %v1247
    %v1249 = vpop.f32.mrb[0].mxu0
    %v1250 = vand.u32 %v71, 4294901760
    %v1251 = vsub.f32 %v71, %v1250
    %1252 = vmatprep.mubr.f32.mxu0 %v1251
    %v1253 = vand.u32 %v70, 4294901760
    %v1254 = vsub.f32 %v70, %v1253
    %1255 = vmatmul.mubr.f32.gmra.mrb[0].mxu0 %v1254
    %v1256 = vpop.f32.mrb[0].mxu0
    %v1257 = vadd.f32 %v923, %v1256
    %v1258 = vpop.f32.mrb[0].mxu0
    %v1259 = vand.u32 %v73, 4294901760
    %v1260 = vsub.f32 %v73, %v1259
    %1261 = vmatprep.mubr.f32.mxu0 %v1260
    %v1262 = vand.u32 %v72, 4294901760
    %v1263 = vsub.f32 %v72, %v1262
    %1264 = vmatmul.mubr.f32.gmra.mrb[0].mxu0 %v1263
    %v1265 = vpop.f32.mrb[0].mxu0
    %v1266 = vadd.f32 %v930, %v1265
    %v1267 = vpop.f32.mrb[0].mxu0
    %v1268 = vand.u32 %v75, 4294901760
    %v1269 = vsub.f32 %v75, %v1268
    %1270 = vmatprep.mubr.f32.mxu0 %v1269
    %v1271 = vand.u32 %v74, 4294901760
    %v1272 = vsub.f32 %v74, %v1271
    %1273 = vmatmul.mubr.f32.gmra.mrb[0].mxu0 %v1272
    %v1274 = vpop.f32.mrb[0].mxu0
    %v1275 = vadd.f32 %v937, %v1274
    %v1276 = vpop.f32.mrb[0].mxu0
    %v1277 = vand.u32 %v77, 4294901760
    %v1278 = vsub.f32 %v77, %v1277
    %1279 = vmatprep.mubr.f32.mxu0 %v1278
    %v1280 = vand.u32 %v76, 4294901760
    %v1281 = vsub.f32 %v76, %v1280
    %1282 = vmatmul.mubr.f32.gmra.mrb[0].mxu0 %v1281
    %v1283 = vpop.f32.mrb[0].mxu0
    %v1284 = vadd.f32 %v944, %v1283
    %v1285 = vpop.f32.mrb[0].mxu0
    %v1286 = vand.u32 %v79, 4294901760
    %v1287 = vsub.f32 %v79, %v1286
    %1288 = vmatprep.mubr.f32.mxu0 %v1287
    %v1289 = vand.u32 %v78, 4294901760
    %v1290 = vsub.f32 %v78, %v1289
    %1291 = vmatmul.mubr.f32.gmra.mrb[0].mxu0 %v1290
    %v1292 = vpop.f32.mrb[0].mxu0
    %v1293 = vadd.f32 %v951, %v1292
    %v1294 = vpop.f32.mrb[0].mxu0
    %v1295 = vand.u32 %v81, 4294901760
    %v1296 = vsub.f32 %v81, %v1295
    %1297 = vmatprep.mubr.f32.mxu0 %v1296
    %v1298 = vand.u32 %v80, 4294901760
    %v1299 = vsub.f32 %v80, %v1298
    %1300 = vmatmul.mubr.f32.gmra.mrb[0].mxu0 %v1299
    %v1301 = vpop.f32.mrb[0].mxu0
    %v1302 = vadd.f32 %v958, %v1301
    %v1303 = vpop.f32.mrb[0].mxu0
    %v1304 = vand.u32 %v83, 4294901760
    %v1305 = vsub.f32 %v83, %v1304
    %1306 = vmatprep.mubr.f32.mxu0 %v1305
    %v1307 = vand.u32 %v82, 4294901760
    %v1308 = vsub.f32 %v82, %v1307
    %1309 = vmatmul.mubr.f32.gmra.mrb[0].mxu0 %v1308
    %v1310 = vpop.f32.mrb[0].mxu0
    %v1311 = vadd.f32 %v965, %v1310
    %v1312 = vpop.f32.mrb[0].mxu0
    %v1313 = vand.u32 %v85, 4294901760
    %v1314 = vsub.f32 %v85, %v1313
    %1315 = vmatprep.mubr.f32.mxu0 %v1314
    %v1316 = vand.u32 %v84, 4294901760
    %v1317 = vsub.f32 %v84, %v1316
    %1318 = vmatmul.mubr.f32.gmra.mrb[0].mxu0 %v1317
    %v1319 = vpop.f32.mrb[0].mxu0
    %v1320 = vadd.f32 %v972, %v1319
    %v1321 = vpop.f32.mrb[0].mxu0
    %v1322 = vand.u32 %v87, 4294901760
    %v1323 = vsub.f32 %v87, %v1322
    %1324 = vmatprep.mubr.f32.mxu0 %v1323
    %v1325 = vand.u32 %v86, 4294901760
    %v1326 = vsub.f32 %v86, %v1325
    %1327 = vmatmul.mubr.f32.gmra.mrb[0].mxu0 %v1326
    %v1328 = vpop.f32.mrb[0].mxu0
    %v1329 = vadd.f32 %v979, %v1328
    %v1330 = vpop.f32.mrb[0].mxu0
    %v1331 = vand.u32 %v89, 4294901760
    %v1332 = vsub.f32 %v89, %v1331
    %1333 = vmatprep.mubr.f32.mxu0 %v1332
    %v1334 = vand.u32 %v88, 4294901760
    %v1335 = vsub.f32 %v88, %v1334
    %1336 = vmatmul.mubr.f32.gmra.mrb[0].mxu0 %v1335
    %v1337 = vpop.f32.mrb[0].mxu0
    %v1338 = vadd.f32 %v986, %v1337
    %v1339 = vpop.f32.mrb[0].mxu0
    %v1340 = vand.u32 %v91, 4294901760
    %v1341 = vsub.f32 %v91, %v1340
    %1342 = vmatprep.mubr.f32.mxu0 %v1341
    %v1343 = vand.u32 %v90, 4294901760
    %v1344 = vsub.f32 %v90, %v1343
    %1345 = vmatmul.mubr.f32.gmra.mrb[0].mxu0 %v1344
    %v1346 = vpop.f32.mrb[0].mxu0
    %v1347 = vadd.f32 %v993, %v1346
    %v1348 = vpop.f32.mrb[0].mxu0
    %1349 = vdwg.mxu0
    %1350 = vmatprep.subr.mxu0 0.0
    %v1351 = vand.u32 %v92, 4294901760
    %1352 = vmatpush1.msra.mxu0 %v1351
    %1353 = vmatprep.subr.mxu0 0.0
    %v1354 = vand.u32 %v93, 4294901760
    %1355 = vmatpush1.msra.mxu0 %v1354
    %1356 = vmatprep.subr.mxu0 0.0
    %v1357 = vand.u32 %v94, 4294901760
    %1358 = vmatpush1.msra.mxu0 %v1357
    %1359 = vmatprep.subr.mxu0 0.0
    %v1360 = vand.u32 %v95, 4294901760
    %1361 = vmatpush1.msra.mxu0 %v1360
    %1362 = vmatprep.subr.mxu0 0.0
    %v1363 = vand.u32 %v96, 4294901760
    %1364 = vmatpush1.msra.mxu0 %v1363
    %1365 = vmatprep.subr.mxu0 0.0
    %v1366 = vand.u32 %v97, 4294901760
    %1367 = vmatpush1.msra.mxu0 %v1366
    %1368 = vmatprep.subr.mxu0 0.0
    %v1369 = vand.u32 %v98, 4294901760
    %1370 = vmatpush1.msra.mxu0 %v1369
    %1371 = vmatprep.subr.mxu0 0.0
    %v1372 = vand.u32 %v99, 4294901760
    %1373 = vmatpush1.msra.mxu0 %v1372
    %1374 = vmatprep.subr.mxu0 0.0
    %v1375 = vand.u32 %v100, 4294901760
    %1376 = vmatpush1.msra.mxu0 %v1375
    %1377 = vmatprep.subr.mxu0 0.0
    %v1378 = vand.u32 %v101, 4294901760
    %1379 = vmatpush1.msra.mxu0 %v1378
    %1380 = vmatprep.subr.mxu0 0.0
    %v1381 = vand.u32 %v102, 4294901760
    %1382 = vmatpush1.msra.mxu0 %v1381
    %1383 = vmatprep.subr.mxu0 0.0
    %v1384 = vand.u32 %v103, 4294901760
    %1385 = vmatpush1.msra.mxu0 %v1384
    %1386 = vmatprep.subr.mxu0 0.0
    %v1387 = vand.u32 %v104, 4294901760
    %1388 = vmatpush1.msra.mxu0 %v1387
    %1389 = vmatprep.subr.mxu0 0.0
    %v1390 = vand.u32 %v105, 4294901760
    %1391 = vmatpush1.msra.mxu0 %v1390
    %1392 = vmatprep.subr.mxu0 0.0
    %v1393 = vand.u32 %v106, 4294901760
    %1394 = vmatpush1.msra.mxu0 %v1393
    %1395 = vmatprep.subr.mxu0 0.0
    %v1396 = vand.u32 %v107, 4294901760
    %1397 = vmatpush1.msra.mxu0 %v1396
    %1398 = vmatprep.subr.mxu0 0.0
    %v1399 = vand.u32 %v108, 4294901760
    %1400 = vmatpush1.msra.mxu0 %v1399
    %1401 = vmatprep.subr.mxu0 0.0
    %v1402 = vand.u32 %v109, 4294901760
    %1403 = vmatpush1.msra.mxu0 %v1402
    %1404 = vmatprep.subr.mxu0 0.0
    %v1405 = vand.u32 %v110, 4294901760
    %1406 = vmatpush1.msra.mxu0 %v1405
    %1407 = vmatprep.subr.mxu0 0.0
    %v1408 = vand.u32 %v111, 4294901760
    %1409 = vmatpush1.msra.mxu0 %v1408
    %1410 = vmatprep.subr.mxu0 0.0
    %v1411 = vand.u32 %v112, 4294901760
    %1412 = vmatpush1.msra.mxu0 %v1411
    %1413 = vmatprep.subr.mxu0 0.0
    %v1414 = vand.u32 %v113, 4294901760
    %1415 = vmatpush1.msra.mxu0 %v1414
    %1416 = vmatprep.subr.mxu0 0.0
    %v1417 = vand.u32 %v114, 4294901760
    %1418 = vmatpush1.msra.mxu0 %v1417
    %1419 = vmatprep.subr.mxu0 0.0
    %v1420 = vand.u32 %v115, 4294901760
    %1421 = vmatpush1.msra.mxu0 %v1420
    %1422 = vmatprep.subr.mxu0 0.0
    %v1423 = vand.u32 %v116, 4294901760
    %1424 = vmatpush1.msra.mxu0 %v1423
    %1425 = vmatprep.subr.mxu0 0.0
    %v1426 = vand.u32 %v117, 4294901760
    %1427 = vmatpush1.msra.mxu0 %v1426
    %1428 = vmatprep.subr.mxu0 0.0
    %v1429 = vand.u32 %v118, 4294901760
    %1430 = vmatpush1.msra.mxu0 %v1429
    %1431 = vmatprep.subr.mxu0 0.0
    %v1432 = vand.u32 %v119, 4294901760
    %1433 = vmatpush1.msra.mxu0 %v1432
    %1434 = vmatprep.subr.mxu0 0.0
    %v1435 = vand.u32 %v120, 4294901760
    %1436 = vmatpush1.msra.mxu0 %v1435
    %1437 = vmatprep.subr.mxu0 0.0
    %v1438 = vand.u32 %v121, 4294901760
    %1439 = vmatpush1.msra.mxu0 %v1438
    %1440 = vmatprep.subr.mxu0 0.0
    %v1441 = vand.u32 %v122, 4294901760
    %1442 = vmatpush1.msra.mxu0 %v1441
    %1443 = vmatprep.subr.mxu0 0.0
    %v1444 = vand.u32 %v123, 4294901760
    %1445 = vmatpush1.msra.mxu0 %v1444
    %v1446 = vand.u32 %v43, 4294901760
    %v1447 = vsub.f32 %v43, %v1446
    %v1448 = vand.u32 %v1447, 4294901760
    %1449 = vmatprep.mubr.f32.mxu0 %v1448
    %v1450 = vand.u32 %v42, 4294901760
    %v1451 = vsub.f32 %v42, %v1450
    %v1452 = vand.u32 %v1451, 4294901760
    %1453 = vmatmul.mubr.f32.gmra.mrb[0].mxu0 %v1452
    %v1454 = vpop.f32.mrb[0].mxu0
    %v1455 = vadd.f32 %v1131, %v1454
    %v1456 = vpop.f32.mrb[0].mxu0
    %v1457 = vand.u32 %v45, 4294901760
    %v1458 = vsub.f32 %v45, %v1457
    %v1459 = vand.u32 %v1458, 4294901760
    %1460 = vmatprep.mubr.f32.mxu0 %v1459
    %v1461 = vand.u32 %v44, 4294901760
    %v1462 = vsub.f32 %v44, %v1461
    %v1463 = vand.u32 %v1462, 4294901760
    %1464 = vmatmul.mubr.f32.gmra.mrb[0].mxu0 %v1463
    %v1465 = vpop.f32.mrb[0].mxu0
    %v1466 = vadd.f32 %v1140, %v1465
    %v1467 = vpop.f32.mrb[0].mxu0
    %v1468 = vand.u32 %v47, 4294901760
    %v1469 = vsub.f32 %v47, %v1468
    %v1470 = vand.u32 %v1469, 4294901760
    %1471 = vmatprep.mubr.f32.mxu0 %v1470
    %v1472 = vand.u32 %v46, 4294901760
    %v1473 = vsub.f32 %v46, %v1472
    %v1474 = vand.u32 %v1473, 4294901760
    %1475 = vmatmul.mubr.f32.gmra.mrb[0].mxu0 %v1474
    %v1476 = vpop.f32.mrb[0].mxu0
    %v1477 = vadd.f32 %v1149, %v1476
    %v1478 = vpop.f32.mrb[0].mxu0
    %v1479 = vand.u32 %v49, 4294901760
    %v1480 = vsub.f32 %v49, %v1479
    %v1481 = vand.u32 %v1480, 4294901760
    %1482 = vmatprep.mubr.f32.mxu0 %v1481
    %v1483 = vand.u32 %v48, 4294901760
    %v1484 = vsub.f32 %v48, %v1483
    %v1485 = vand.u32 %v1484, 4294901760
    %1486 = vmatmul.mubr.f32.gmra.mrb[0].mxu0 %v1485
    %v1487 = vpop.f32.mrb[0].mxu0
    %v1488 = vadd.f32 %v1158, %v1487
    %v1489 = vpop.f32.mrb[0].mxu0
    %v1490 = vand.u32 %v51, 4294901760
    %v1491 = vsub.f32 %v51, %v1490
    %v1492 = vand.u32 %v1491, 4294901760
    %1493 = vmatprep.mubr.f32.mxu0 %v1492
    %v1494 = vand.u32 %v50, 4294901760
    %v1495 = vsub.f32 %v50, %v1494
    %v1496 = vand.u32 %v1495, 4294901760
    %1497 = vmatmul.mubr.f32.gmra.mrb[0].mxu0 %v1496
    %v1498 = vpop.f32.mrb[0].mxu0
    %v1499 = vadd.f32 %v1167, %v1498
    %v1500 = vpop.f32.mrb[0].mxu0
    %v1501 = vand.u32 %v53, 4294901760
    %v1502 = vsub.f32 %v53, %v1501
    %v1503 = vand.u32 %v1502, 4294901760
    %1504 = vmatprep.mubr.f32.mxu0 %v1503
    %v1505 = vand.u32 %v52, 4294901760
    %v1506 = vsub.f32 %v52, %v1505
    %v1507 = vand.u32 %v1506, 4294901760
    %1508 = vmatmul.mubr.f32.gmra.mrb[0].mxu0 %v1507
    %v1509 = vpop.f32.mrb[0].mxu0
    %v1510 = vadd.f32 %v1176, %v1509
    %v1511 = vpop.f32.mrb[0].mxu0
    %v1512 = vand.u32 %v55, 4294901760
    %v1513 = vsub.f32 %v55, %v1512
    %v1514 = vand.u32 %v1513, 4294901760
    %1515 = vmatprep.mubr.f32.mxu0 %v1514
    %v1516 = vand.u32 %v54, 4294901760
    %v1517 = vsub.f32 %v54, %v1516
    %v1518 = vand.u32 %v1517, 4294901760
    %1519 = vmatmul.mubr.f32.gmra.mrb[0].mxu0 %v1518
    %v1520 = vpop.f32.mrb[0].mxu0
    %v1521 = vadd.f32 %v1185, %v1520
    %v1522 = vpop.f32.mrb[0].mxu0
    %v1523 = vand.u32 %v57, 4294901760
    %v1524 = vsub.f32 %v57, %v1523
    %v1525 = vand.u32 %v1524, 4294901760
    %1526 = vmatprep.mubr.f32.mxu0 %v1525
    %v1527 = vand.u32 %v56, 4294901760
    %v1528 = vsub.f32 %v56, %v1527
    %v1529 = vand.u32 %v1528, 4294901760
    %1530 = vmatmul.mubr.f32.gmra.mrb[0].mxu0 %v1529
    %v1531 = vpop.f32.mrb[0].mxu0
    %v1532 = vadd.f32 %v1194, %v1531
    %v1533 = vpop.f32.mrb[0].mxu0
    %v1534 = vand.u32 %v59, 4294901760
    %v1535 = vsub.f32 %v59, %v1534
    %v1536 = vand.u32 %v1535, 4294901760
    %1537 = vmatprep.mubr.f32.mxu0 %v1536
    %v1538 = vand.u32 %v58, 4294901760
    %v1539 = vsub.f32 %v58, %v1538
    %v1540 = vand.u32 %v1539, 4294901760
    %1541 = vmatmul.mubr.f32.gmra.mrb[0].mxu0 %v1540
    %v1542 = vpop.f32.mrb[0].mxu0
    %v1543 = vadd.f32 %v1203, %v1542
    %v1544 = vpop.f32.mrb[0].mxu0
    %v1545 = vand.u32 %v61, 4294901760
    %v1546 = vsub.f32 %v61, %v1545
    %v1547 = vand.u32 %v1546, 4294901760
    %1548 = vmatprep.mubr.f32.mxu0 %v1547
    %v1549 = vand.u32 %v60, 4294901760
    %v1550 = vsub.f32 %v60, %v1549
    %v1551 = vand.u32 %v1550, 4294901760
    %1552 = vmatmul.mubr.f32.gmra.mrb[0].mxu0 %v1551
    %v1553 = vpop.f32.mrb[0].mxu0
    %v1554 = vadd.f32 %v1212, %v1553
    %v1555 = vpop.f32.mrb[0].mxu0
    %v1556 = vand.u32 %v63, 4294901760
    %v1557 = vsub.f32 %v63, %v1556
    %v1558 = vand.u32 %v1557, 4294901760
    %1559 = vmatprep.mubr.f32.mxu0 %v1558
    %v1560 = vand.u32 %v62, 4294901760
    %v1561 = vsub.f32 %v62, %v1560
    %v1562 = vand.u32 %v1561, 4294901760
    %1563 = vmatmul.mubr.f32.gmra.mrb[0].mxu0 %v1562
    %v1564 = vpop.f32.mrb[0].mxu0
    %v1565 = vadd.f32 %v1221, %v1564
    %v1566 = vpop.f32.mrb[0].mxu0
    %v1567 = vand.u32 %v65, 4294901760
    %v1568 = vsub.f32 %v65, %v1567
    %v1569 = vand.u32 %v1568, 4294901760
    %1570 = vmatprep.mubr.f32.mxu0 %v1569
    %v1571 = vand.u32 %v64, 4294901760
    %v1572 = vsub.f32 %v64, %v1571
    %v1573 = vand.u32 %v1572, 4294901760
    %1574 = vmatmul.mubr.f32.gmra.mrb[0].mxu0 %v1573
    %v1575 = vpop.f32.mrb[0].mxu0
    %v1576 = vadd.f32 %v1230, %v1575
    %v1577 = vpop.f32.mrb[0].mxu0
    %v1578 = vand.u32 %v67, 4294901760
    %v1579 = vsub.f32 %v67, %v1578
    %v1580 = vand.u32 %v1579, 4294901760
    %1581 = vmatprep.mubr.f32.mxu0 %v1580
    %v1582 = vand.u32 %v66, 4294901760
    %v1583 = vsub.f32 %v66, %v1582
    %v1584 = vand.u32 %v1583, 4294901760
    %1585 = vmatmul.mubr.f32.gmra.mrb[0].mxu0 %v1584
    %v1586 = vpop.f32.mrb[0].mxu0
    %v1587 = vadd.f32 %v1239, %v1586
    %v1588 = vpop.f32.mrb[0].mxu0
    %v1589 = vand.u32 %v69, 4294901760
    %v1590 = vsub.f32 %v69, %v1589
    %v1591 = vand.u32 %v1590, 4294901760
    %1592 = vmatprep.mubr.f32.mxu0 %v1591
    %v1593 = vand.u32 %v68, 4294901760
    %v1594 = vsub.f32 %v68, %v1593
    %v1595 = vand.u32 %v1594, 4294901760
    %1596 = vmatmul.mubr.f32.gmra.mrb[0].mxu0 %v1595
    %v1597 = vpop.f32.mrb[0].mxu0
    %v1598 = vadd.f32 %v1248, %v1597
    %v1599 = vpop.f32.mrb[0].mxu0
    %v1600 = vand.u32 %v71, 4294901760
    %v1601 = vsub.f32 %v71, %v1600
    %v1602 = vand.u32 %v1601, 4294901760
    %1603 = vmatprep.mubr.f32.mxu0 %v1602
    %v1604 = vand.u32 %v70, 4294901760
    %v1605 = vsub.f32 %v70, %v1604
    %v1606 = vand.u32 %v1605, 4294901760
    %1607 = vmatmul.mubr.f32.gmra.mrb[0].mxu0 %v1606
    %v1608 = vpop.f32.mrb[0].mxu0
    %v1609 = vadd.f32 %v1257, %v1608
    %v1610 = vpop.f32.mrb[0].mxu0
    %v1611 = vand.u32 %v73, 4294901760
    %v1612 = vsub.f32 %v73, %v1611
    %v1613 = vand.u32 %v1612, 4294901760
    %1614 = vmatprep.mubr.f32.mxu0 %v1613
    %v1615 = vand.u32 %v72, 4294901760
    %v1616 = vsub.f32 %v72, %v1615
    %v1617 = vand.u32 %v1616, 4294901760
    %1618 = vmatmul.mubr.f32.gmra.mrb[0].mxu0 %v1617
    %v1619 = vpop.f32.mrb[0].mxu0
    %v1620 = vadd.f32 %v1266, %v1619
    %v1621 = vpop.f32.mrb[0].mxu0
    %v1622 = vand.u32 %v75, 4294901760
    %v1623 = vsub.f32 %v75, %v1622
    %v1624 = vand.u32 %v1623, 4294901760
    %1625 = vmatprep.mubr.f32.mxu0 %v1624
    %v1626 = vand.u32 %v74, 4294901760
    %v1627 = vsub.f32 %v74, %v1626
    %v1628 = vand.u32 %v1627, 4294901760
    %1629 = vmatmul.mubr.f32.gmra.mrb[0].mxu0 %v1628
    %v1630 = vpop.f32.mrb[0].mxu0
    %v1631 = vadd.f32 %v1275, %v1630
    %v1632 = vpop.f32.mrb[0].mxu0
    %v1633 = vand.u32 %v77, 4294901760
    %v1634 = vsub.f32 %v77, %v1633
    %v1635 = vand.u32 %v1634, 4294901760
    %1636 = vmatprep.mubr.f32.mxu0 %v1635
    %v1637 = vand.u32 %v76, 4294901760
    %v1638 = vsub.f32 %v76, %v1637
    %v1639 = vand.u32 %v1638, 4294901760
    %1640 = vmatmul.mubr.f32.gmra.mrb[0].mxu0 %v1639
    %v1641 = vpop.f32.mrb[0].mxu0
    %v1642 = vadd.f32 %v1284, %v1641
    %v1643 = vpop.f32.mrb[0].mxu0
    %v1644 = vand.u32 %v79, 4294901760
    %v1645 = vsub.f32 %v79, %v1644
    %v1646 = vand.u32 %v1645, 4294901760
    %1647 = vmatprep.mubr.f32.mxu0 %v1646
    %v1648 = vand.u32 %v78, 4294901760
    %v1649 = vsub.f32 %v78, %v1648
    %v1650 = vand.u32 %v1649, 4294901760
    %1651 = vmatmul.mubr.f32.gmra.mrb[0].mxu0 %v1650
    %v1652 = vpop.f32.mrb[0].mxu0
    %v1653 = vadd.f32 %v1293, %v1652
    %v1654 = vpop.f32.mrb[0].mxu0
    %v1655 = vand.u32 %v81, 4294901760
    %v1656 = vsub.f32 %v81, %v1655
    %v1657 = vand.u32 %v1656, 4294901760
    %1658 = vmatprep.mubr.f32.mxu0 %v1657
    %v1659 = vand.u32 %v80, 4294901760
    %v1660 = vsub.f32 %v80, %v1659
    %v1661 = vand.u32 %v1660, 4294901760
    %1662 = vmatmul.mubr.f32.gmra.mrb[0].mxu0 %v1661
    %v1663 = vpop.f32.mrb[0].mxu0
    %v1664 = vadd.f32 %v1302, %v1663
    %v1665 = vpop.f32.mrb[0].mxu0
    %v1666 = vand.u32 %v83, 4294901760
    %v1667 = vsub.f32 %v83, %v1666
    %v1668 = vand.u32 %v1667, 4294901760
    %1669 = vmatprep.mubr.f32.mxu0 %v1668
    %v1670 = vand.u32 %v82, 4294901760
    %v1671 = vsub.f32 %v82, %v1670
    %v1672 = vand.u32 %v1671, 4294901760
    %1673 = vmatmul.mubr.f32.gmra.mrb[0].mxu0 %v1672
    %v1674 = vpop.f32.mrb[0].mxu0
    %v1675 = vadd.f32 %v1311, %v1674
    %v1676 = vpop.f32.mrb[0].mxu0
    %v1677 = vand.u32 %v85, 4294901760
    %v1678 = vsub.f32 %v85, %v1677
    %v1679 = vand.u32 %v1678, 4294901760
    %1680 = vmatprep.mubr.f32.mxu0 %v1679
    %v1681 = vand.u32 %v84, 4294901760
    %v1682 = vsub.f32 %v84, %v1681
    %v1683 = vand.u32 %v1682, 4294901760
    %1684 = vmatmul.mubr.f32.gmra.mrb[0].mxu0 %v1683
    %v1685 = vpop.f32.mrb[0].mxu0
    %v1686 = vadd.f32 %v1320, %v1685
    %v1687 = vpop.f32.mrb[0].mxu0
    %v1688 = vand.u32 %v87, 4294901760
    %v1689 = vsub.f32 %v87, %v1688
    %v1690 = vand.u32 %v1689, 4294901760
    %1691 = vmatprep.mubr.f32.mxu0 %v1690
    %v1692 = vand.u32 %v86, 4294901760
    %v1693 = vsub.f32 %v86, %v1692
    %v1694 = vand.u32 %v1693, 4294901760
    %1695 = vmatmul.mubr.f32.gmra.mrb[0].mxu0 %v1694
    %v1696 = vpop.f32.mrb[0].mxu0
    %v1697 = vadd.f32 %v1329, %v1696
    %v1698 = vpop.f32.mrb[0].mxu0
    %v1699 = vand.u32 %v89, 4294901760
    %v1700 = vsub.f32 %v89, %v1699
    %v1701 = vand.u32 %v1700, 4294901760
    %1702 = vmatprep.mubr.f32.mxu0 %v1701
    %v1703 = vand.u32 %v88, 4294901760
    %v1704 = vsub.f32 %v88, %v1703
    %v1705 = vand.u32 %v1704, 4294901760
    %1706 = vmatmul.mubr.f32.gmra.mrb[0].mxu0 %v1705
    %v1707 = vpop.f32.mrb[0].mxu0
    %v1708 = vadd.f32 %v1338, %v1707
    %v1709 = vpop.f32.mrb[0].mxu0
    %v1710 = vand.u32 %v91, 4294901760
    %v1711 = vsub.f32 %v91, %v1710
    %v1712 = vand.u32 %v1711, 4294901760
    %1713 = vmatprep.mubr.f32.mxu0 %v1712
    %v1714 = vand.u32 %v90, 4294901760
    %v1715 = vsub.f32 %v90, %v1714
    %v1716 = vand.u32 %v1715, 4294901760
    %1717 = vmatmul.mubr.f32.gmra.mrb[0].mxu0 %v1716
    %v1718 = vpop.f32.mrb[0].mxu0
    %v1719 = vadd.f32 %v1347, %v1718
    %v1720 = vpop.f32.mrb[0].mxu0
    %1721 = vdwg.mxu0
    %1722 = vmatprep.subr.mxu0 0.0
    %v1723 = vand.u32 %v92, 4294901760
    %v1724 = vsub.f32 %v92, %v1723
    %v1725 = vand.u32 %v1724, 4294901760
    %1726 = vmatpush1.msra.mxu0 %v1725
    %1727 = vmatprep.subr.mxu0 0.0
    %v1728 = vand.u32 %v93, 4294901760
    %v1729 = vsub.f32 %v93, %v1728
    %v1730 = vand.u32 %v1729, 4294901760
    %1731 = vmatpush1.msra.mxu0 %v1730
    %1732 = vmatprep.subr.mxu0 0.0
    %v1733 = vand.u32 %v94, 4294901760
    %v1734 = vsub.f32 %v94, %v1733
    %v1735 = vand.u32 %v1734, 4294901760
    %1736 = vmatpush1.msra.mxu0 %v1735
    %1737 = vmatprep.subr.mxu0 0.0
    %v1738 = vand.u32 %v95, 4294901760
    %v1739 = vsub.f32 %v95, %v1738
    %v1740 = vand.u32 %v1739, 4294901760
    %1741 = vmatpush1.msra.mxu0 %v1740
    %1742 = vmatprep.subr.mxu0 0.0
    %v1743 = vand.u32 %v96, 4294901760
    %v1744 = vsub.f32 %v96, %v1743
    %v1745 = vand.u32 %v1744, 4294901760
    %1746 = vmatpush1.msra.mxu0 %v1745
    %1747 = vmatprep.subr.mxu0 0.0
    %v1748 = vand.u32 %v97, 4294901760
    %v1749 = vsub.f32 %v97, %v1748
    %v1750 = vand.u32 %v1749, 4294901760
    %1751 = vmatpush1.msra.mxu0 %v1750
    %1752 = vmatprep.subr.mxu0 0.0
    %v1753 = vand.u32 %v98, 4294901760
    %v1754 = vsub.f32 %v98, %v1753
    %v1755 = vand.u32 %v1754, 4294901760
    %1756 = vmatpush1.msra.mxu0 %v1755
    %1757 = vmatprep.subr.mxu0 0.0
    %v1758 = vand.u32 %v99, 4294901760
    %v1759 = vsub.f32 %v99, %v1758
    %v1760 = vand.u32 %v1759, 4294901760
    %1761 = vmatpush1.msra.mxu0 %v1760
    %1762 = vmatprep.subr.mxu0 0.0
    %v1763 = vand.u32 %v100, 4294901760
    %v1764 = vsub.f32 %v100, %v1763
    %v1765 = vand.u32 %v1764, 4294901760
    %1766 = vmatpush1.msra.mxu0 %v1765
    %1767 = vmatprep.subr.mxu0 0.0
    %v1768 = vand.u32 %v101, 4294901760
    %v1769 = vsub.f32 %v101, %v1768
    %v1770 = vand.u32 %v1769, 4294901760
    %1771 = vmatpush1.msra.mxu0 %v1770
    %1772 = vmatprep.subr.mxu0 0.0
    %v1773 = vand.u32 %v102, 4294901760
    %v1774 = vsub.f32 %v102, %v1773
    %v1775 = vand.u32 %v1774, 4294901760
    %1776 = vmatpush1.msra.mxu0 %v1775
    %1777 = vmatprep.subr.mxu0 0.0
    %v1778 = vand.u32 %v103, 4294901760
    %v1779 = vsub.f32 %v103, %v1778
    %v1780 = vand.u32 %v1779, 4294901760
    %1781 = vmatpush1.msra.mxu0 %v1780
    %1782 = vmatprep.subr.mxu0 0.0
    %v1783 = vand.u32 %v104, 4294901760
    %v1784 = vsub.f32 %v104, %v1783
    %v1785 = vand.u32 %v1784, 4294901760
    %1786 = vmatpush1.msra.mxu0 %v1785
    %1787 = vmatprep.subr.mxu0 0.0
    %v1788 = vand.u32 %v105, 4294901760
    %v1789 = vsub.f32 %v105, %v1788
    %v1790 = vand.u32 %v1789, 4294901760
    %1791 = vmatpush1.msra.mxu0 %v1790
    %1792 = vmatprep.subr.mxu0 0.0
    %v1793 = vand.u32 %v106, 4294901760
    %v1794 = vsub.f32 %v106, %v1793
    %v1795 = vand.u32 %v1794, 4294901760
    %1796 = vmatpush1.msra.mxu0 %v1795
    %1797 = vmatprep.subr.mxu0 0.0
    %v1798 = vand.u32 %v107, 4294901760
    %v1799 = vsub.f32 %v107, %v1798
    %v1800 = vand.u32 %v1799, 4294901760
    %1801 = vmatpush1.msra.mxu0 %v1800
    %1802 = vmatprep.subr.mxu0 0.0
    %v1803 = vand.u32 %v108, 4294901760
    %v1804 = vsub.f32 %v108, %v1803
    %v1805 = vand.u32 %v1804, 4294901760
    %1806 = vmatpush1.msra.mxu0 %v1805
    %1807 = vmatprep.subr.mxu0 0.0
    %v1808 = vand.u32 %v109, 4294901760
    %v1809 = vsub.f32 %v109, %v1808
    %v1810 = vand.u32 %v1809, 4294901760
    %1811 = vmatpush1.msra.mxu0 %v1810
    %1812 = vmatprep.subr.mxu0 0.0
    %v1813 = vand.u32 %v110, 4294901760
    %v1814 = vsub.f32 %v110, %v1813
    %v1815 = vand.u32 %v1814, 4294901760
    %1816 = vmatpush1.msra.mxu0 %v1815
    %1817 = vmatprep.subr.mxu0 0.0
    %v1818 = vand.u32 %v111, 4294901760
    %v1819 = vsub.f32 %v111, %v1818
    %v1820 = vand.u32 %v1819, 4294901760
    %1821 = vmatpush1.msra.mxu0 %v1820
    %1822 = vmatprep.subr.mxu0 0.0
    %v1823 = vand.u32 %v112, 4294901760
    %v1824 = vsub.f32 %v112, %v1823
    %v1825 = vand.u32 %v1824, 4294901760
    %1826 = vmatpush1.msra.mxu0 %v1825
    %1827 = vmatprep.subr.mxu0 0.0
    %v1828 = vand.u32 %v113, 4294901760
    %v1829 = vsub.f32 %v113, %v1828
    %v1830 = vand.u32 %v1829, 4294901760
    %1831 = vmatpush1.msra.mxu0 %v1830
    %1832 = vmatprep.subr.mxu0 0.0
    %v1833 = vand.u32 %v114, 4294901760
    %v1834 = vsub.f32 %v114, %v1833
    %v1835 = vand.u32 %v1834, 4294901760
    %1836 = vmatpush1.msra.mxu0 %v1835
    %1837 = vmatprep.subr.mxu0 0.0
    %v1838 = vand.u32 %v115, 4294901760
    %v1839 = vsub.f32 %v115, %v1838
    %v1840 = vand.u32 %v1839, 4294901760
    %1841 = vmatpush1.msra.mxu0 %v1840
    %1842 = vmatprep.subr.mxu0 0.0
    %v1843 = vand.u32 %v116, 4294901760
    %v1844 = vsub.f32 %v116, %v1843
    %v1845 = vand.u32 %v1844, 4294901760
    %1846 = vmatpush1.msra.mxu0 %v1845
    %1847 = vmatprep.subr.mxu0 0.0
    %v1848 = vand.u32 %v117, 4294901760
    %v1849 = vsub.f32 %v117, %v1848
    %v1850 = vand.u32 %v1849, 4294901760
    %1851 = vmatpush1.msra.mxu0 %v1850
    %1852 = vmatprep.subr.mxu0 0.0
    %v1853 = vand.u32 %v118, 4294901760
    %v1854 = vsub.f32 %v118, %v1853
    %v1855 = vand.u32 %v1854, 4294901760
    %1856 = vmatpush1.msra.mxu0 %v1855
    %1857 = vmatprep.subr.mxu0 0.0
    %v1858 = vand.u32 %v119, 4294901760
    %v1859 = vsub.f32 %v119, %v1858
    %v1860 = vand.u32 %v1859, 4294901760
    %1861 = vmatpush1.msra.mxu0 %v1860
    %1862 = vmatprep.subr.mxu0 0.0
    %v1863 = vand.u32 %v120, 4294901760
    %v1864 = vsub.f32 %v120, %v1863
    %v1865 = vand.u32 %v1864, 4294901760
    %1866 = vmatpush1.msra.mxu0 %v1865
    %1867 = vmatprep.subr.mxu0 0.0
    %v1868 = vand.u32 %v121, 4294901760
    %v1869 = vsub.f32 %v121, %v1868
    %v1870 = vand.u32 %v1869, 4294901760
    %1871 = vmatpush1.msra.mxu0 %v1870
    %1872 = vmatprep.subr.mxu0 0.0
    %v1873 = vand.u32 %v122, 4294901760
    %v1874 = vsub.f32 %v122, %v1873
    %v1875 = vand.u32 %v1874, 4294901760
    %1876 = vmatpush1.msra.mxu0 %v1875
    %1877 = vmatprep.subr.mxu0 0.0
    %v1878 = vand.u32 %v123, 4294901760
    %v1879 = vsub.f32 %v123, %v1878
    %v1880 = vand.u32 %v1879, 4294901760
    %1881 = vmatpush1.msra.mxu0 %v1880
    %v1882 = vand.u32 %v43, 4294901760
    %1883 = vmatprep.mubr.f32.mxu0 %v1882
    %v1884 = vand.u32 %v42, 4294901760
    %1885 = vmatmul.mubr.f32.gmra.mrb[0].mxu0 %v1884
    %v1886 = vpop.f32.mrb[0].mxu0
    %v1887 = vadd.f32 %v1455, %v1886
    %v1888 = vpop.f32.mrb[0].mxu0
    %v1889 = vand.u32 %v45, 4294901760
    %1890 = vmatprep.mubr.f32.mxu0 %v1889
    %v1891 = vand.u32 %v44, 4294901760
    %1892 = vmatmul.mubr.f32.gmra.mrb[0].mxu0 %v1891
    %v1893 = vpop.f32.mrb[0].mxu0
    %v1894 = vadd.f32 %v1466, %v1893
    %v1895 = vpop.f32.mrb[0].mxu0
    %v1896 = vand.u32 %v47, 4294901760
    %1897 = vmatprep.mubr.f32.mxu0 %v1896
    %v1898 = vand.u32 %v46, 4294901760
    %1899 = vmatmul.mubr.f32.gmra.mrb[0].mxu0 %v1898
    %v1900 = vpop.f32.mrb[0].mxu0
    %v1901 = vadd.f32 %v1477, %v1900
    %v1902 = vpop.f32.mrb[0].mxu0
    %v1903 = vand.u32 %v49, 4294901760
    %1904 = vmatprep.mubr.f32.mxu0 %v1903
    %v1905 = vand.u32 %v48, 4294901760
    %1906 = vmatmul.mubr.f32.gmra.mrb[0].mxu0 %v1905
    %v1907 = vpop.f32.mrb[0].mxu0
    %v1908 = vadd.f32 %v1488, %v1907
    %v1909 = vpop.f32.mrb[0].mxu0
    %v1910 = vand.u32 %v51, 4294901760
    %1911 = vmatprep.mubr.f32.mxu0 %v1910
    %v1912 = vand.u32 %v50, 4294901760
    %1913 = vmatmul.mubr.f32.gmra.mrb[0].mxu0 %v1912
    %v1914 = vpop.f32.mrb[0].mxu0
    %v1915 = vadd.f32 %v1499, %v1914
    %v1916 = vpop.f32.mrb[0].mxu0
    %v1917 = vand.u32 %v53, 4294901760
    %1918 = vmatprep.mubr.f32.mxu0 %v1917
    %v1919 = vand.u32 %v52, 4294901760
    %1920 = vmatmul.mubr.f32.gmra.mrb[0].mxu0 %v1919
    %v1921 = vpop.f32.mrb[0].mxu0
    %v1922 = vadd.f32 %v1510, %v1921
    %v1923 = vpop.f32.mrb[0].mxu0
    %v1924 = vand.u32 %v55, 4294901760
    %1925 = vmatprep.mubr.f32.mxu0 %v1924
    %v1926 = vand.u32 %v54, 4294901760
    %1927 = vmatmul.mubr.f32.gmra.mrb[0].mxu0 %v1926
    %v1928 = vpop.f32.mrb[0].mxu0
    %v1929 = vadd.f32 %v1521, %v1928
    %v1930 = vpop.f32.mrb[0].mxu0
    %v1931 = vand.u32 %v57, 4294901760
    %1932 = vmatprep.mubr.f32.mxu0 %v1931
    %v1933 = vand.u32 %v56, 4294901760
    %1934 = vmatmul.mubr.f32.gmra.mrb[0].mxu0 %v1933
    %v1935 = vpop.f32.mrb[0].mxu0
    %v1936 = vadd.f32 %v1532, %v1935
    %v1937 = vpop.f32.mrb[0].mxu0
    %v1938 = vand.u32 %v59, 4294901760
    %1939 = vmatprep.mubr.f32.mxu0 %v1938
    %v1940 = vand.u32 %v58, 4294901760
    %1941 = vmatmul.mubr.f32.gmra.mrb[0].mxu0 %v1940
    %v1942 = vpop.f32.mrb[0].mxu0
    %v1943 = vadd.f32 %v1543, %v1942
    %v1944 = vpop.f32.mrb[0].mxu0
    %v1945 = vand.u32 %v61, 4294901760
    %1946 = vmatprep.mubr.f32.mxu0 %v1945
    %v1947 = vand.u32 %v60, 4294901760
    %1948 = vmatmul.mubr.f32.gmra.mrb[0].mxu0 %v1947
    %v1949 = vpop.f32.mrb[0].mxu0
    %v1950 = vadd.f32 %v1554, %v1949
    %v1951 = vpop.f32.mrb[0].mxu0
    %v1952 = vand.u32 %v63, 4294901760
    %1953 = vmatprep.mubr.f32.mxu0 %v1952
    %v1954 = vand.u32 %v62, 4294901760
    %1955 = vmatmul.mubr.f32.gmra.mrb[0].mxu0 %v1954
    %v1956 = vpop.f32.mrb[0].mxu0
    %v1957 = vadd.f32 %v1565, %v1956
    %v1958 = vpop.f32.mrb[0].mxu0
    %v1959 = vand.u32 %v65, 4294901760
    %1960 = vmatprep.mubr.f32.mxu0 %v1959
    %v1961 = vand.u32 %v64, 4294901760
    %1962 = vmatmul.mubr.f32.gmra.mrb[0].mxu0 %v1961
    %v1963 = vpop.f32.mrb[0].mxu0
    %v1964 = vadd.f32 %v1576, %v1963
    %v1965 = vpop.f32.mrb[0].mxu0
    %v1966 = vand.u32 %v67, 4294901760
    %1967 = vmatprep.mubr.f32.mxu0 %v1966
    %v1968 = vand.u32 %v66, 4294901760
    %1969 = vmatmul.mubr.f32.gmra.mrb[0].mxu0 %v1968
    %v1970 = vpop.f32.mrb[0].mxu0
    %v1971 = vadd.f32 %v1587, %v1970
    %v1972 = vpop.f32.mrb[0].mxu0
    %v1973 = vand.u32 %v69, 4294901760
    %1974 = vmatprep.mubr.f32.mxu0 %v1973
    %v1975 = vand.u32 %v68, 4294901760
    %1976 = vmatmul.mubr.f32.gmra.mrb[0].mxu0 %v1975
    %v1977 = vpop.f32.mrb[0].mxu0
    %v1978 = vadd.f32 %v1598, %v1977
    %v1979 = vpop.f32.mrb[0].mxu0
    %v1980 = vand.u32 %v71, 4294901760
    %1981 = vmatprep.mubr.f32.mxu0 %v1980
    %v1982 = vand.u32 %v70, 4294901760
    %1983 = vmatmul.mubr.f32.gmra.mrb[0].mxu0 %v1982
    %v1984 = vpop.f32.mrb[0].mxu0
    %v1985 = vadd.f32 %v1609, %v1984
    %v1986 = vpop.f32.mrb[0].mxu0
    %v1987 = vand.u32 %v73, 4294901760
    %1988 = vmatprep.mubr.f32.mxu0 %v1987
    %v1989 = vand.u32 %v72, 4294901760
    %1990 = vmatmul.mubr.f32.gmra.mrb[0].mxu0 %v1989
    %v1991 = vpop.f32.mrb[0].mxu0
    %v1992 = vadd.f32 %v1620, %v1991
    %v1993 = vpop.f32.mrb[0].mxu0
    %v1994 = vand.u32 %v75, 4294901760
    %1995 = vmatprep.mubr.f32.mxu0 %v1994
    %v1996 = vand.u32 %v74, 4294901760
    %1997 = vmatmul.mubr.f32.gmra.mrb[0].mxu0 %v1996
    %v1998 = vpop.f32.mrb[0].mxu0
    %v1999 = vadd.f32 %v1631, %v1998
    %v2000 = vpop.f32.mrb[0].mxu0
    %v2001 = vand.u32 %v77, 4294901760
    %2002 = vmatprep.mubr.f32.mxu0 %v2001
    %v2003 = vand.u32 %v76, 4294901760
    %2004 = vmatmul.mubr.f32.gmra.mrb[0].mxu0 %v2003
    %v2005 = vpop.f32.mrb[0].mxu0
    %v2006 = vadd.f32 %v1642, %v2005
    %v2007 = vpop.f32.mrb[0].mxu0
    %v2008 = vand.u32 %v79, 4294901760
    %2009 = vmatprep.mubr.f32.mxu0 %v2008
    %v2010 = vand.u32 %v78, 4294901760
    %2011 = vmatmul.mubr.f32.gmra.mrb[0].mxu0 %v2010
    %v2012 = vpop.f32.mrb[0].mxu0
    %v2013 = vadd.f32 %v1653, %v2012
    %v2014 = vpop.f32.mrb[0].mxu0
    %v2015 = vand.u32 %v81, 4294901760
    %2016 = vmatprep.mubr.f32.mxu0 %v2015
    %v2017 = vand.u32 %v80, 4294901760
    %2018 = vmatmul.mubr.f32.gmra.mrb[0].mxu0 %v2017
    %v2019 = vpop.f32.mrb[0].mxu0
    %v2020 = vadd.f32 %v1664, %v2019
    %v2021 = vpop.f32.mrb[0].mxu0
    %v2022 = vand.u32 %v83, 4294901760
    %2023 = vmatprep.mubr.f32.mxu0 %v2022
    %v2024 = vand.u32 %v82, 4294901760
    %2025 = vmatmul.mubr.f32.gmra.mrb[0].mxu0 %v2024
    %v2026 = vpop.f32.mrb[0].mxu0
    %v2027 = vadd.f32 %v1675, %v2026
    %v2028 = vpop.f32.mrb[0].mxu0
    %v2029 = vand.u32 %v85, 4294901760
    %2030 = vmatprep.mubr.f32.mxu0 %v2029
    %v2031 = vand.u32 %v84, 4294901760
    %2032 = vmatmul.mubr.f32.gmra.mrb[0].mxu0 %v2031
    %v2033 = vpop.f32.mrb[0].mxu0
    %v2034 = vadd.f32 %v1686, %v2033
    %v2035 = vpop.f32.mrb[0].mxu0
    %v2036 = vand.u32 %v87, 4294901760
    %2037 = vmatprep.mubr.f32.mxu0 %v2036
    %v2038 = vand.u32 %v86, 4294901760
    %2039 = vmatmul.mubr.f32.gmra.mrb[0].mxu0 %v2038
    %v2040 = vpop.f32.mrb[0].mxu0
    %v2041 = vadd.f32 %v1697, %v2040
    %v2042 = vpop.f32.mrb[0].mxu0
    %v2043 = vand.u32 %v89, 4294901760
    %2044 = vmatprep.mubr.f32.mxu0 %v2043
    %v2045 = vand.u32 %v88, 4294901760
    %2046 = vmatmul.mubr.f32.gmra.mrb[0].mxu0 %v2045
    %v2047 = vpop.f32.mrb[0].mxu0
    %v2048 = vadd.f32 %v1708, %v2047
    %v2049 = vpop.f32.mrb[0].mxu0
    %v2050 = vand.u32 %v91, 4294901760
    %2051 = vmatprep.mubr.f32.mxu0 %v2050
    %v2052 = vand.u32 %v90, 4294901760
    %2053 = vmatmul.mubr.f32.gmra.mrb[0].mxu0 %v2052
    %v2054 = vpop.f32.mrb[0].mxu0
    %v2055 = vadd.f32 %v1719, %v2054
    %v2056 = vpop.f32.mrb[0].mxu0
    %2057 = vdwg.mxu0
    %2058 = vmatprep.subr.mxu0 0.0
    %v2059 = vand.u32 %v92, 4294901760
    %2060 = vmatpush1.msra.mxu0 %v2059
    %2061 = vmatprep.subr.mxu0 0.0
    %v2062 = vand.u32 %v93, 4294901760
    %2063 = vmatpush1.msra.mxu0 %v2062
    %2064 = vmatprep.subr.mxu0 0.0
    %v2065 = vand.u32 %v94, 4294901760
    %2066 = vmatpush1.msra.mxu0 %v2065
    %2067 = vmatprep.subr.mxu0 0.0
    %v2068 = vand.u32 %v95, 4294901760
    %2069 = vmatpush1.msra.mxu0 %v2068
    %2070 = vmatprep.subr.mxu0 0.0
    %v2071 = vand.u32 %v96, 4294901760
    %2072 = vmatpush1.msra.mxu0 %v2071
    %2073 = vmatprep.subr.mxu0 0.0
    %v2074 = vand.u32 %v97, 4294901760
    %2075 = vmatpush1.msra.mxu0 %v2074
    %2076 = vmatprep.subr.mxu0 0.0
    %v2077 = vand.u32 %v98, 4294901760
    %2078 = vmatpush1.msra.mxu0 %v2077
    %2079 = vmatprep.subr.mxu0 0.0
    %v2080 = vand.u32 %v99, 4294901760
    %2081 = vmatpush1.msra.mxu0 %v2080
    %2082 = vmatprep.subr.mxu0 0.0
    %v2083 = vand.u32 %v100, 4294901760
    %2084 = vmatpush1.msra.mxu0 %v2083
    %2085 = vmatprep.subr.mxu0 0.0
    %v2086 = vand.u32 %v101, 4294901760
    %2087 = vmatpush1.msra.mxu0 %v2086
    %2088 = vmatprep.subr.mxu0 0.0
    %v2089 = vand.u32 %v102, 4294901760
    %2090 = vmatpush1.msra.mxu0 %v2089
    %2091 = vmatprep.subr.mxu0 0.0
    %v2092 = vand.u32 %v103, 4294901760
    %2093 = vmatpush1.msra.mxu0 %v2092
    %2094 = vmatprep.subr.mxu0 0.0
    %v2095 = vand.u32 %v104, 4294901760
    %2096 = vmatpush1.msra.mxu0 %v2095
    %2097 = vmatprep.subr.mxu0 0.0
    %v2098 = vand.u32 %v105, 4294901760
    %2099 = vmatpush1.msra.mxu0 %v2098
    %2100 = vmatprep.subr.mxu0 0.0
    %v2101 = vand.u32 %v106, 4294901760
    %2102 = vmatpush1.msra.mxu0 %v2101
    %2103 = vmatprep.subr.mxu0 0.0
    %v2104 = vand.u32 %v107, 4294901760
    %2105 = vmatpush1.msra.mxu0 %v2104
    %2106 = vmatprep.subr.mxu0 0.0
    %v2107 = vand.u32 %v108, 4294901760
    %2108 = vmatpush1.msra.mxu0 %v2107
    %2109 = vmatprep.subr.mxu0 0.0
    %v2110 = vand.u32 %v109, 4294901760
    %2111 = vmatpush1.msra.mxu0 %v2110
    %2112 = vmatprep.subr.mxu0 0.0
    %v2113 = vand.u32 %v110, 4294901760
    %2114 = vmatpush1.msra.mxu0 %v2113
    %2115 = vmatprep.subr.mxu0 0.0
    %v2116 = vand.u32 %v111, 4294901760
    %2117 = vmatpush1.msra.mxu0 %v2116
    %2118 = vmatprep.subr.mxu0 0.0
    %v2119 = vand.u32 %v112, 4294901760
    %2120 = vmatpush1.msra.mxu0 %v2119
    %2121 = vmatprep.subr.mxu0 0.0
    %v2122 = vand.u32 %v113, 4294901760
    %2123 = vmatpush1.msra.mxu0 %v2122
    %2124 = vmatprep.subr.mxu0 0.0
    %v2125 = vand.u32 %v114, 4294901760
    %2126 = vmatpush1.msra.mxu0 %v2125
    %2127 = vmatprep.subr.mxu0 0.0
    %v2128 = vand.u32 %v115, 4294901760
    %2129 = vmatpush1.msra.mxu0 %v2128
    %2130 = vmatprep.subr.mxu0 0.0
    %v2131 = vand.u32 %v116, 4294901760
    %2132 = vmatpush1.msra.mxu0 %v2131
    %2133 = vmatprep.subr.mxu0 0.0
    %v2134 = vand.u32 %v117, 4294901760
    %2135 = vmatpush1.msra.mxu0 %v2134
    %2136 = vmatprep.subr.mxu0 0.0
    %v2137 = vand.u32 %v118, 4294901760
    %2138 = vmatpush1.msra.mxu0 %v2137
    %2139 = vmatprep.subr.mxu0 0.0
    %v2140 = vand.u32 %v119, 4294901760
    %2141 = vmatpush1.msra.mxu0 %v2140
    %2142 = vmatprep.subr.mxu0 0.0
    %v2143 = vand.u32 %v120, 4294901760
    %2144 = vmatpush1.msra.mxu0 %v2143
    %2145 = vmatprep.subr.mxu0 0.0
    %v2146 = vand.u32 %v121, 4294901760
    %2147 = vmatpush1.msra.mxu0 %v2146
    %2148 = vmatprep.subr.mxu0 0.0
    %v2149 = vand.u32 %v122, 4294901760
    %2150 = vmatpush1.msra.mxu0 %v2149
    %2151 = vmatprep.subr.mxu0 0.0
    %v2152 = vand.u32 %v123, 4294901760
    %2153 = vmatpush1.msra.mxu0 %v2152
    %v2154 = vand.u32 %v43, 4294901760
    %2155 = vmatprep.mubr.f32.mxu0 %v2154
    %v2156 = vand.u32 %v42, 4294901760
    %2157 = vmatmul.mubr.f32.gmra.mrb[0].mxu0 %v2156
    %v2158 = vpop.f32.mrb[0].mxu0
    %v2159 = vadd.f32 %v1887, %v2158
    %v2160 = vpop.f32.mrb[0].mxu0
    %v2161 = vand.u32 %v45, 4294901760
    %2162 = vmatprep.mubr.f32.mxu0 %v2161
    %v2163 = vand.u32 %v44, 4294901760
    %2164 = vmatmul.mubr.f32.gmra.mrb[0].mxu0 %v2163
    %v2165 = vpop.f32.mrb[0].mxu0
    %v2166 = vadd.f32 %v1894, %v2165
    %v2167 = vpop.f32.mrb[0].mxu0
    %v2168 = vand.u32 %v47, 4294901760
    %2169 = vmatprep.mubr.f32.mxu0 %v2168
    %v2170 = vand.u32 %v46, 4294901760
    %2171 = vmatmul.mubr.f32.gmra.mrb[0].mxu0 %v2170
    %v2172 = vpop.f32.mrb[0].mxu0
    %v2173 = vadd.f32 %v1901, %v2172
    %v2174 = vpop.f32.mrb[0].mxu0
    %v2175 = vand.u32 %v49, 4294901760
    %2176 = vmatprep.mubr.f32.mxu0 %v2175
    %v2177 = vand.u32 %v48, 4294901760
    %2178 = vmatmul.mubr.f32.gmra.mrb[0].mxu0 %v2177
    %v2179 = vpop.f32.mrb[0].mxu0
    %v2180 = vadd.f32 %v1908, %v2179
    %v2181 = vpop.f32.mrb[0].mxu0
    %v2182 = vand.u32 %v51, 4294901760
    %2183 = vmatprep.mubr.f32.mxu0 %v2182
    %v2184 = vand.u32 %v50, 4294901760
    %2185 = vmatmul.mubr.f32.gmra.mrb[0].mxu0 %v2184
    %v2186 = vpop.f32.mrb[0].mxu0
    %v2187 = vadd.f32 %v1915, %v2186
    %v2188 = vpop.f32.mrb[0].mxu0
    %v2189 = vand.u32 %v53, 4294901760
    %2190 = vmatprep.mubr.f32.mxu0 %v2189
    %v2191 = vand.u32 %v52, 4294901760
    %2192 = vmatmul.mubr.f32.gmra.mrb[0].mxu0 %v2191
    %v2193 = vpop.f32.mrb[0].mxu0
    %v2194 = vadd.f32 %v1922, %v2193
    %v2195 = vpop.f32.mrb[0].mxu0
    %v2196 = vand.u32 %v55, 4294901760
    %2197 = vmatprep.mubr.f32.mxu0 %v2196
    %v2198 = vand.u32 %v54, 4294901760
    %2199 = vmatmul.mubr.f32.gmra.mrb[0].mxu0 %v2198
    %v2200 = vpop.f32.mrb[0].mxu0
    %v2201 = vadd.f32 %v1929, %v2200
    %v2202 = vpop.f32.mrb[0].mxu0
    %v2203 = vand.u32 %v57, 4294901760
    %2204 = vmatprep.mubr.f32.mxu0 %v2203
    %v2205 = vand.u32 %v56, 4294901760
    %2206 = vmatmul.mubr.f32.gmra.mrb[0].mxu0 %v2205
    %v2207 = vpop.f32.mrb[0].mxu0
    %v2208 = vadd.f32 %v1936, %v2207
    %v2209 = vpop.f32.mrb[0].mxu0
    %v2210 = vand.u32 %v59, 4294901760
    %2211 = vmatprep.mubr.f32.mxu0 %v2210
    %v2212 = vand.u32 %v58, 4294901760
    %2213 = vmatmul.mubr.f32.gmra.mrb[0].mxu0 %v2212
    %v2214 = vpop.f32.mrb[0].mxu0
    %v2215 = vadd.f32 %v1943, %v2214
    %v2216 = vpop.f32.mrb[0].mxu0
    %v2217 = vand.u32 %v61, 4294901760
    %2218 = vmatprep.mubr.f32.mxu0 %v2217
    %v2219 = vand.u32 %v60, 4294901760
    %2220 = vmatmul.mubr.f32.gmra.mrb[0].mxu0 %v2219
    %v2221 = vpop.f32.mrb[0].mxu0
    %v2222 = vadd.f32 %v1950, %v2221
    %v2223 = vpop.f32.mrb[0].mxu0
    %v2224 = vand.u32 %v63, 4294901760
    %2225 = vmatprep.mubr.f32.mxu0 %v2224
    %v2226 = vand.u32 %v62, 4294901760
    %2227 = vmatmul.mubr.f32.gmra.mrb[0].mxu0 %v2226
    %v2228 = vpop.f32.mrb[0].mxu0
    %v2229 = vadd.f32 %v1957, %v2228
    %v2230 = vpop.f32.mrb[0].mxu0
    %v2231 = vand.u32 %v65, 4294901760
    %2232 = vmatprep.mubr.f32.mxu0 %v2231
    %v2233 = vand.u32 %v64, 4294901760
    %2234 = vmatmul.mubr.f32.gmra.mrb[0].mxu0 %v2233
    %v2235 = vpop.f32.mrb[0].mxu0
    %v2236 = vadd.f32 %v1964, %v2235
    %v2237 = vpop.f32.mrb[0].mxu0
    %v2238 = vand.u32 %v67, 4294901760
    %2239 = vmatprep.mubr.f32.mxu0 %v2238
    %v2240 = vand.u32 %v66, 4294901760
    %2241 = vmatmul.mubr.f32.gmra.mrb[0].mxu0 %v2240
    %v2242 = vpop.f32.mrb[0].mxu0
    %v2243 = vadd.f32 %v1971, %v2242
    %v2244 = vpop.f32.mrb[0].mxu0
    %v2245 = vand.u32 %v69, 4294901760
    %2246 = vmatprep.mubr.f32.mxu0 %v2245
    %v2247 = vand.u32 %v68, 4294901760
    %2248 = vmatmul.mubr.f32.gmra.mrb[0].mxu0 %v2247
    %v2249 = vpop.f32.mrb[0].mxu0
    %v2250 = vadd.f32 %v1978, %v2249
    %v2251 = vpop.f32.mrb[0].mxu0
    %v2252 = vand.u32 %v71, 4294901760
    %2253 = vmatprep.mubr.f32.mxu0 %v2252
    %v2254 = vand.u32 %v70, 4294901760
    %2255 = vmatmul.mubr.f32.gmra.mrb[0].mxu0 %v2254
    %v2256 = vpop.f32.mrb[0].mxu0
    %v2257 = vadd.f32 %v1985, %v2256
    %v2258 = vpop.f32.mrb[0].mxu0
    %v2259 = vand.u32 %v73, 4294901760
    %2260 = vmatprep.mubr.f32.mxu0 %v2259
    %v2261 = vand.u32 %v72, 4294901760
    %2262 = vmatmul.mubr.f32.gmra.mrb[0].mxu0 %v2261
    %v2263 = vpop.f32.mrb[0].mxu0
    %v2264 = vadd.f32 %v1992, %v2263
    %v2265 = vpop.f32.mrb[0].mxu0
    %v2266 = vand.u32 %v75, 4294901760
    %2267 = vmatprep.mubr.f32.mxu0 %v2266
    %v2268 = vand.u32 %v74, 4294901760
    %2269 = vmatmul.mubr.f32.gmra.mrb[0].mxu0 %v2268
    %v2270 = vpop.f32.mrb[0].mxu0
    %v2271 = vadd.f32 %v1999, %v2270
    %v2272 = vpop.f32.mrb[0].mxu0
    %v2273 = vand.u32 %v77, 4294901760
    %2274 = vmatprep.mubr.f32.mxu0 %v2273
    %v2275 = vand.u32 %v76, 4294901760
    %2276 = vmatmul.mubr.f32.gmra.mrb[0].mxu0 %v2275
    %v2277 = vpop.f32.mrb[0].mxu0
    %v2278 = vadd.f32 %v2006, %v2277
    %v2279 = vpop.f32.mrb[0].mxu0
    %v2280 = vand.u32 %v79, 4294901760
    %2281 = vmatprep.mubr.f32.mxu0 %v2280
    %v2282 = vand.u32 %v78, 4294901760
    %2283 = vmatmul.mubr.f32.gmra.mrb[0].mxu0 %v2282
    %v2284 = vpop.f32.mrb[0].mxu0
    %v2285 = vadd.f32 %v2013, %v2284
    %v2286 = vpop.f32.mrb[0].mxu0
    %v2287 = vand.u32 %v81, 4294901760
    %2288 = vmatprep.mubr.f32.mxu0 %v2287
    %v2289 = vand.u32 %v80, 4294901760
    %2290 = vmatmul.mubr.f32.gmra.mrb[0].mxu0 %v2289
    %v2291 = vpop.f32.mrb[0].mxu0
    %v2292 = vadd.f32 %v2020, %v2291
    %v2293 = vpop.f32.mrb[0].mxu0
    %v2294 = vand.u32 %v83, 4294901760
    %2295 = vmatprep.mubr.f32.mxu0 %v2294
    %v2296 = vand.u32 %v82, 4294901760
    %2297 = vmatmul.mubr.f32.gmra.mrb[0].mxu0 %v2296
    %v2298 = vpop.f32.mrb[0].mxu0
    %v2299 = vadd.f32 %v2027, %v2298
    %v2300 = vpop.f32.mrb[0].mxu0
    %v2301 = vand.u32 %v85, 4294901760
    %2302 = vmatprep.mubr.f32.mxu0 %v2301
    %v2303 = vand.u32 %v84, 4294901760
    %2304 = vmatmul.mubr.f32.gmra.mrb[0].mxu0 %v2303
    %v2305 = vpop.f32.mrb[0].mxu0
    %v2306 = vadd.f32 %v2034, %v2305
    %v2307 = vpop.f32.mrb[0].mxu0
    %v2308 = vand.u32 %v87, 4294901760
    %2309 = vmatprep.mubr.f32.mxu0 %v2308
    %v2310 = vand.u32 %v86, 4294901760
    %2311 = vmatmul.mubr.f32.gmra.mrb[0].mxu0 %v2310
    %v2312 = vpop.f32.mrb[0].mxu0
    %v2313 = vadd.f32 %v2041, %v2312
    %v2314 = vpop.f32.mrb[0].mxu0
    %v2315 = vand.u32 %v89, 4294901760
    %2316 = vmatprep.mubr.f32.mxu0 %v2315
    %v2317 = vand.u32 %v88, 4294901760
    %2318 = vmatmul.mubr.f32.gmra.mrb[0].mxu0 %v2317
    %v2319 = vpop.f32.mrb[0].mxu0
    %v2320 = vadd.f32 %v2048, %v2319
    %v2321 = vpop.f32.mrb[0].mxu0
    %v2322 = vand.u32 %v91, 4294901760
    %2323 = vmatprep.mubr.f32.mxu0 %v2322
    %v2324 = vand.u32 %v90, 4294901760
    %2325 = vmatmul.mubr.f32.gmra.mrb[0].mxu0 %v2324
    %v2326 = vpop.f32.mrb[0].mxu0
    %v2327 = vadd.f32 %v2055, %v2326
    %v2328 = vpop.f32.mrb[0].mxu0
    %2329 = vdwg.mxu0
    %v2330 = vld [vmem:[%s1] sm:$0xff]
    %v2331 = vld [vmem:[%s1 + $0x8] sm:$0xff]
    %v2332 = vld [vmem:[%s1 + $0x10] sm:$0xff]
    %v2333 = vld [vmem:[%s1 + $0x18] sm:$0xff]
    %v2334 = vld [vmem:[%s1 + $0x20] sm:$0xff]
    %v2335 = vld [vmem:[%s1 + $0x28] sm:$0xff]
    %v2336 = vld [vmem:[%s1 + $0x30] sm:$0xff]
    %v2337 = vld [vmem:[%s1 + $0x38] sm:$0xff]
    %v2338 = vld [vmem:[%s1 + $0x40] sm:$0xff]
    %v2339 = vld [vmem:[%s1 + $0x48] sm:$0xff]
    %v2340 = vld [vmem:[%s1 + $0x50] sm:$0xff]
    %v2341 = vld [vmem:[%s1 + $0x58] sm:$0xff]
    %v2342 = vld [vmem:[%s1 + $0x60] sm:$0xff]
    %v2343 = vld [vmem:[%s1 + $0x68] sm:$0xff]
    %v2344 = vld [vmem:[%s1 + $0x70] sm:$0xff]
    %v2345 = vld [vmem:[%s1 + $0x78] sm:$0xff]
    %v2346 = vld [vmem:[%s1 + $0x80] sm:$0xff]
    %v2347 = vld [vmem:[%s1 + $0x88] sm:$0xff]
    %v2348 = vld [vmem:[%s1 + $0x90] sm:$0xff]
    %v2349 = vld [vmem:[%s1 + $0x98] sm:$0xff]
    %v2350 = vld [vmem:[%s1 + $0xa0] sm:$0xff]
    %v2351 = vld [vmem:[%s1 + $0xa8] sm:$0xff]
    %v2352 = vld [vmem:[%s1 + $0xb0] sm:$0xff]
    %v2353 = vld [vmem:[%s1 + $0xb8] sm:$0xff]
    %v2354 = vld [vmem:[%s1 + $0xc0] sm:$0xff]
    %v2355 = vadd.f32 %v2159, %v2330
    %v2356 = vadd.f32 %v2166, %v2331
    %v2357 = vadd.f32 %v2173, %v2332
    %v2358 = vadd.f32 %v2180, %v2333
    %v2359 = vadd.f32 %v2187, %v2334
    %v2360 = vadd.f32 %v2194, %v2335
    %v2361 = vadd.f32 %v2201, %v2336
    %v2362 = vadd.f32 %v2208, %v2337
    %v2363 = vadd.f32 %v2215, %v2338
    %v2364 = vadd.f32 %v2222, %v2339
    %v2365 = vadd.f32 %v2229, %v2340
    %v2366 = vadd.f32 %v2236, %v2341
    %v2367 = vadd.f32 %v2243, %v2342
    %v2368 = vadd.f32 %v2250, %v2343
    %v2369 = vadd.f32 %v2257, %v2344
    %v2370 = vadd.f32 %v2264, %v2345
    %v2371 = vadd.f32 %v2271, %v2346
    %v2372 = vadd.f32 %v2278, %v2347
    %v2373 = vadd.f32 %v2285, %v2348
    %v2374 = vadd.f32 %v2292, %v2349
    %v2375 = vadd.f32 %v2299, %v2350
    %v2376 = vadd.f32 %v2306, %v2351
    %v2377 = vadd.f32 %v2313, %v2352
    %v2378 = vadd.f32 %v2320, %v2353
    %v2379 = vadd.f32 %v2327, %v2354
    %vm2380 = vcmp.ge.f32.partialorder %v2355, 0.0
    %vm2381 = vcmp.ge.f32.partialorder %v2356, 0.0
    %vm2382 = vcmp.ge.f32.partialorder %v2357, 0.0
    %vm2383 = vcmp.ge.f32.partialorder %v2358, 0.0
    %vm2384 = vcmp.ge.f32.partialorder %v2359, 0.0
    %vm2385 = vcmp.ge.f32.partialorder %v2360, 0.0
    %vm2386 = vcmp.ge.f32.partialorder %v2361, 0.0
    %vm2387 = vcmp.ge.f32.partialorder %v2362, 0.0
    %vm2388 = vcmp.ge.f32.partialorder %v2363, 0.0
    %vm2389 = vcmp.ge.f32.partialorder %v2364, 0.0
    %vm2390 = vcmp.ge.f32.partialorder %v2365, 0.0
    %vm2391 = vcmp.ge.f32.partialorder %v2366, 0.0
    %vm2392 = vcmp.ge.f32.partialorder %v2367, 0.0
    %vm2393 = vcmp.ge.f32.partialorder %v2368, 0.0
    %vm2394 = vcmp.ge.f32.partialorder %v2369, 0.0
    %vm2395 = vcmp.ge.f32.partialorder %v2370, 0.0
    %vm2396 = vcmp.ge.f32.partialorder %v2371, 0.0
    %vm2397 = vcmp.ge.f32.partialorder %v2372, 0.0
    %vm2398 = vcmp.ge.f32.partialorder %v2373, 0.0
    %vm2399 = vcmp.ge.f32.partialorder %v2374, 0.0
    %vm2400 = vcmp.ge.f32.partialorder %v2375, 0.0
    %vm2401 = vcmp.ge.f32.partialorder %v2376, 0.0
    %vm2402 = vcmp.ge.f32.partialorder %v2377, 0.0
    %vm2403 = vcmp.ge.f32.partialorder %v2378, 0.0
    %vm2404 = vcmp.ge.f32.partialorder %v2379, 0.0
    %v2405 = vmul.f32 %v2355, 0.01
    %v2406 = vmul.f32 %v2356, 0.01
    %v2407 = vmul.f32 %v2357, 0.01
    %v2408 = vmul.f32 %v2358, 0.01
    %v2409 = vmul.f32 %v2359, 0.01
    %v2410 = vmul.f32 %v2360, 0.01
    %v2411 = vmul.f32 %v2361, 0.01
    %v2412 = vmul.f32 %v2362, 0.01
    %v2413 = vmul.f32 %v2363, 0.01
    %v2414 = vmul.f32 %v2364, 0.01
    %v2415 = vmul.f32 %v2365, 0.01
    %v2416 = vmul.f32 %v2366, 0.01
    %v2417 = vmul.f32 %v2367, 0.01
    %v2418 = vmul.f32 %v2368, 0.01
    %v2419 = vmul.f32 %v2369, 0.01
    %v2420 = vmul.f32 %v2370, 0.01
    %v2421 = vmul.f32 %v2371, 0.01
    %v2422 = vmul.f32 %v2372, 0.01
    %v2423 = vmul.f32 %v2373, 0.01
    %v2424 = vmul.f32 %v2374, 0.01
    %v2425 = vmul.f32 %v2375, 0.01
    %v2426 = vmul.f32 %v2376, 0.01
    %v2427 = vmul.f32 %v2377, 0.01
    %v2428 = vmul.f32 %v2378, 0.01
    %v2429 = vmul.f32 %v2379, 0.01
    %v2430 = vsel %vm2380, %v2355, %v2405
    %v2431 = vsel %vm2381, %v2356, %v2406
    %v2432 = vsel %vm2382, %v2357, %v2407
    %v2433 = vsel %vm2383, %v2358, %v2408
    %v2434 = vsel %vm2384, %v2359, %v2409
    %v2435 = vsel %vm2385, %v2360, %v2410
    %v2436 = vsel %vm2386, %v2361, %v2411
    %v2437 = vsel %vm2387, %v2362, %v2412
    %v2438 = vsel %vm2388, %v2363, %v2413
    %v2439 = vsel %vm2389, %v2364, %v2414
    %v2440 = vsel %vm2390, %v2365, %v2415
    %v2441 = vsel %vm2391, %v2366, %v2416
    %v2442 = vsel %vm2392, %v2367, %v2417
    %v2443 = vsel %vm2393, %v2368, %v2418
    %v2444 = vsel %vm2394, %v2369, %v2419
    %v2445 = vsel %vm2395, %v2370, %v2420
    %v2446 = vsel %vm2396, %v2371, %v2421
    %v2447 = vsel %vm2397, %v2372, %v2422
    %v2448 = vsel %vm2398, %v2373, %v2423
    %v2449 = vsel %vm2399, %v2374, %v2424
    %v2450 = vsel %vm2400, %v2375, %v2425
    %v2451 = vsel %vm2401, %v2376, %v2426
    %v2452 = vsel %vm2402, %v2377, %v2427
    %v2453 = vsel %vm2403, %v2378, %v2428
    %v2454 = vsel %vm2404, %v2379, %v2429
    %vm2455 = vcmask 64512
    %v2456 = vsel %vm2455, %v2430, -inf
    %2457 = vmax.xlane.f32.xlu0 %v2456
    %v2458 = vpop.xlane.xlu0 %2457
    %v2459 = vsel %vm2455, %v2431, -inf
    %2460 = vmax.xlane.f32.xlu0 %v2459
    %v2461 = vpop.xlane.xlu0 %2460
    %v2462 = vsel %vm2455, %v2432, -inf
    %2463 = vmax.xlane.f32.xlu0 %v2462
    %v2464 = vpop.xlane.xlu0 %2463
    %v2465 = vsel %vm2455, %v2433, -inf
    %2466 = vmax.xlane.f32.xlu0 %v2465
    %v2467 = vpop.xlane.xlu0 %2466
    %v2468 = vsel %vm2455, %v2434, -inf
    %2469 = vmax.xlane.f32.xlu0 %v2468
    %v2470 = vpop.xlane.xlu0 %2469
    %v2471 = vsel %vm2455, %v2435, -inf
    %2472 = vmax.xlane.f32.xlu0 %v2471
    %v2473 = vpop.xlane.xlu0 %2472
    %v2474 = vsel %vm2455, %v2436, -inf
    %2475 = vmax.xlane.f32.xlu0 %v2474
    %v2476 = vpop.xlane.xlu0 %2475
    %v2477 = vsel %vm2455, %v2437, -inf
    %2478 = vmax.xlane.f32.xlu0 %v2477
    %v2479 = vpop.xlane.xlu0 %2478
    %v2480 = vsel %vm2455, %v2438, -inf
    %2481 = vmax.xlane.f32.xlu0 %v2480
    %v2482 = vpop.xlane.xlu0 %2481
    %v2483 = vsel %vm2455, %v2439, -inf
    %2484 = vmax.xlane.f32.xlu0 %v2483
    %v2485 = vpop.xlane.xlu0 %2484
    %v2486 = vsel %vm2455, %v2440, -inf
    %2487 = vmax.xlane.f32.xlu0 %v2486
    %v2488 = vpop.xlane.xlu0 %2487
    %v2489 = vsel %vm2455, %v2441, -inf
    %2490 = vmax.xlane.f32.xlu0 %v2489
    %v2491 = vpop.xlane.xlu0 %2490
    %v2492 = vsel %vm2455, %v2442, -inf
    %2493 = vmax.xlane.f32.xlu0 %v2492
    %v2494 = vpop.xlane.xlu0 %2493
    %v2495 = vsel %vm2455, %v2443, -inf
    %2496 = vmax.xlane.f32.xlu0 %v2495
    %v2497 = vpop.xlane.xlu0 %2496
    %v2498 = vsel %vm2455, %v2444, -inf
    %2499 = vmax.xlane.f32.xlu0 %v2498
    %v2500 = vpop.xlane.xlu0 %2499
    %v2501 = vsel %vm2455, %v2445, -inf
    %2502 = vmax.xlane.f32.xlu0 %v2501
    %v2503 = vpop.xlane.xlu0 %2502
    %v2504 = vsel %vm2455, %v2446, -inf
    %2505 = vmax.xlane.f32.xlu0 %v2504
    %v2506 = vpop.xlane.xlu0 %2505
    %v2507 = vsel %vm2455, %v2447, -inf
    %2508 = vmax.xlane.f32.xlu0 %v2507
    %v2509 = vpop.xlane.xlu0 %2508
    %v2510 = vsel %vm2455, %v2448, -inf
    %2511 = vmax.xlane.f32.xlu0 %v2510
    %v2512 = vpop.xlane.xlu0 %2511
    %v2513 = vsel %vm2455, %v2449, -inf
    %2514 = vmax.xlane.f32.xlu0 %v2513
    %v2515 = vpop.xlane.xlu0 %2514
    %v2516 = vsel %vm2455, %v2450, -inf
    %2517 = vmax.xlane.f32.xlu0 %v2516
    %v2518 = vpop.xlane.xlu0 %2517
    %v2519 = vsel %vm2455, %v2451, -inf
    %2520 = vmax.xlane.f32.xlu0 %v2519
    %v2521 = vpop.xlane.xlu0 %2520
    %v2522 = vsel %vm2455, %v2452, -inf
    %2523 = vmax.xlane.f32.xlu0 %v2522
    %v2524 = vpop.xlane.xlu0 %2523
    %v2525 = vsel %vm2455, %v2453, -inf
    %2526 = vmax.xlane.f32.xlu0 %v2525
    %v2527 = vpop.xlane.xlu0 %2526
    %v2528 = vsel %vm2455, %v2454, -inf
    %2529 = vmax.xlane.f32.xlu0 %v2528
    %v2530 = vpop.xlane.xlu0 %2529
    %v2531 = vsub.f32 %v2430, %v2458
    %v2532 = vsub.f32 %v2431, %v2461
    %v2533 = vsub.f32 %v2432, %v2464
    %v2534 = vsub.f32 %v2433, %v2467
    %v2535 = vsub.f32 %v2434, %v2470
    %v2536 = vsub.f32 %v2435, %v2473
    %v2537 = vsub.f32 %v2436, %v2476
    %v2538 = vsub.f32 %v2437, %v2479
    %v2539 = vsub.f32 %v2438, %v2482
    %v2540 = vsub.f32 %v2439, %v2485
    %v2541 = vsub.f32 %v2440, %v2488
    %v2542 = vsub.f32 %v2441, %v2491
    %v2543 = vsub.f32 %v2442, %v2494
    %v2544 = vsub.f32 %v2443, %v2497
    %v2545 = vsub.f32 %v2444, %v2500
    %v2546 = vsub.f32 %v2445, %v2503
    %v2547 = vsub.f32 %v2446, %v2506
    %v2548 = vsub.f32 %v2447, %v2509
    %v2549 = vsub.f32 %v2448, %v2512
    %v2550 = vsub.f32 %v2449, %v2515
    %v2551 = vsub.f32 %v2450, %v2518
    %v2552 = vsub.f32 %v2451, %v2521
    %v2553 = vsub.f32 %v2452, %v2524
    %v2554 = vsub.f32 %v2453, %v2527
    %v2555 = vsub.f32 %v2454, %v2530
    %v2556 = vmul.f32 %v2531, 1.442695
    %v2557 = vpow.pop %v2556
    %v2558 = vmul.f32 %v2532, 1.442695
    %v2559 = vpow.pop %v2558
    %v2560 = vmul.f32 %v2533, 1.442695
    %v2561 = vpow.pop %v2560
    %v2562 = vmul.f32 %v2534, 1.442695
    %v2563 = vpow.pop %v2562
    %v2564 = vmul.f32 %v2535, 1.442695
    %v2565 = vpow.pop %v2564
    %v2566 = vmul.f32 %v2536, 1.442695
    %v2567 = vpow.pop %v2566
    %v2568 = vmul.f32 %v2537, 1.442695
    %v2569 = vpow.pop %v2568
    %v2570 = vmul.f32 %v2538, 1.442695
    %v2571 = vpow.pop %v2570
    %v2572 = vmul.f32 %v2539, 1.442695
    %v2573 = vpow.pop %v2572
    %v2574 = vmul.f32 %v2540, 1.442695
    %v2575 = vpow.pop %v2574
    %v2576 = vmul.f32 %v2541, 1.442695
    %v2577 = vpow.pop %v2576
    %v2578 = vmul.f32 %v2542, 1.442695
    %v2579 = vpow.pop %v2578
    %v2580 = vmul.f32 %v2543, 1.442695
    %v2581 = vpow.pop %v2580
    %v2582 = vmul.f32 %v2544, 1.442695
    %v2583 = vpow.pop %v2582
    %v2584 = vmul.f32 %v2545, 1.442695
    %v2585 = vpow.pop %v2584
    %v2586 = vmul.f32 %v2546, 1.442695
    %v2587 = vpow.pop %v2586
    %v2588 = vmul.f32 %v2547, 1.442695
    %v2589 = vpow.pop %v2588
    %v2590 = vmul.f32 %v2548, 1.442695
    %v2591 = vpow.pop %v2590
    %v2592 = vmul.f32 %v2549, 1.442695
    %v2593 = vpow.pop %v2592
    %v2594 = vmul.f32 %v2550, 1.442695
    %v2595 = vpow.pop %v2594
    %v2596 = vmul.f32 %v2551, 1.442695
    %v2597 = vpow.pop %v2596
    %v2598 = vmul.f32 %v2552, 1.442695
    %v2599 = vpow.pop %v2598
    %v2600 = vmul.f32 %v2553, 1.442695
    %v2601 = vpow.pop %v2600
    %v2602 = vmul.f32 %v2554, 1.442695
    %v2603 = vpow.pop %v2602
    %v2604 = vmul.f32 %v2555, 1.442695
    %v2605 = vpow.pop %v2604
    %v2606 = vsel %vm2455, %v2557, 0.0
    %2607 = vadd.xlane.f32.xlu0 %v2606
    %v2608 = vpop.xlane.xlu0 %2607
    %v2609 = vsel %vm2455, %v2559, 0.0
    %2610 = vadd.xlane.f32.xlu0 %v2609
    %v2611 = vpop.xlane.xlu0 %2610
    %v2612 = vsel %vm2455, %v2561, 0.0
    %2613 = vadd.xlane.f32.xlu0 %v2612
    %v2614 = vpop.xlane.xlu0 %2613
    %v2615 = vsel %vm2455, %v2563, 0.0
    %2616 = vadd.xlane.f32.xlu0 %v2615
    %v2617 = vpop.xlane.xlu0 %2616
    %v2618 = vsel %vm2455, %v2565, 0.0
    %2619 = vadd.xlane.f32.xlu0 %v2618
    %v2620 = vpop.xlane.xlu0 %2619
    %v2621 = vsel %vm2455, %v2567, 0.0
    %2622 = vadd.xlane.f32.xlu0 %v2621
    %v2623 = vpop.xlane.xlu0 %2622
    %v2624 = vsel %vm2455, %v2569, 0.0
    %2625 = vadd.xlane.f32.xlu0 %v2624
    %v2626 = vpop.xlane.xlu0 %2625
    %v2627 = vsel %vm2455, %v2571, 0.0
    %2628 = vadd.xlane.f32.xlu0 %v2627
    %v2629 = vpop.xlane.xlu0 %2628
    %v2630 = vsel %vm2455, %v2573, 0.0
    %2631 = vadd.xlane.f32.xlu0 %v2630
    %v2632 = vpop.xlane.xlu0 %2631
    %v2633 = vsel %vm2455, %v2575, 0.0
    %2634 = vadd.xlane.f32.xlu0 %v2633
    %v2635 = vpop.xlane.xlu0 %2634
    %v2636 = vsel %vm2455, %v2577, 0.0
    %2637 = vadd.xlane.f32.xlu0 %v2636
    %v2638 = vpop.xlane.xlu0 %2637
    %v2639 = vsel %vm2455, %v2579, 0.0
    %2640 = vadd.xlane.f32.xlu0 %v2639
    %v2641 = vpop.xlane.xlu0 %2640
    %v2642 = vsel %vm2455, %v2581, 0.0
    %2643 = vadd.xlane.f32.xlu0 %v2642
    %v2644 = vpop.xlane.xlu0 %2643
    %v2645 = vsel %vm2455, %v2583, 0.0
    %2646 = vadd.xlane.f32.xlu0 %v2645
    %v2647 = vpop.xlane.xlu0 %2646
    %v2648 = vsel %vm2455, %v2585, 0.0
    %2649 = vadd.xlane.f32.xlu0 %v2648
    %v2650 = vpop.xlane.xlu0 %2649
    %v2651 = vsel %vm2455, %v2587, 0.0
    %2652 = vadd.xlane.f32.xlu0 %v2651
    %v2653 = vpop.xlane.xlu0 %2652
    %v2654 = vsel %vm2455, %v2589, 0.0
    %2655 = vadd.xlane.f32.xlu0 %v2654
    %v2656 = vpop.xlane.xlu0 %2655
    %v2657 = vsel %vm2455, %v2591, 0.0
    %2658 = vadd.xlane.f32.xlu0 %v2657
    %v2659 = vpop.xlane.xlu0 %2658
    %v2660 = vsel %vm2455, %v2593, 0.0
    %2661 = vadd.xlane.f32.xlu0 %v2660
    %v2662 = vpop.xlane.xlu0 %2661
    %v2663 = vsel %vm2455, %v2595, 0.0
    %2664 = vadd.xlane.f32.xlu0 %v2663
    %v2665 = vpop.xlane.xlu0 %2664
    %v2666 = vsel %vm2455, %v2597, 0.0
    %2667 = vadd.xlane.f32.xlu0 %v2666
    %v2668 = vpop.xlane.xlu0 %2667
    %v2669 = vsel %vm2455, %v2599, 0.0
    %2670 = vadd.xlane.f32.xlu0 %v2669
    %v2671 = vpop.xlane.xlu0 %2670
    %v2672 = vsel %vm2455, %v2601, 0.0
    %2673 = vadd.xlane.f32.xlu0 %v2672
    %v2674 = vpop.xlane.xlu0 %2673
    %v2675 = vsel %vm2455, %v2603, 0.0
    %2676 = vadd.xlane.f32.xlu0 %v2675
    %v2677 = vpop.xlane.xlu0 %2676
    %v2678 = vsel %vm2455, %v2605, 0.0
    %2679 = vadd.xlane.f32.xlu0 %v2678
    %v2680 = vpop.xlane.xlu0 %2679
    %v2681 = vrcp.pop %v2608
    %v2682 = vmul.f32 %v2557, %v2681
    %v2683 = vrcp.pop %v2611
    %v2684 = vmul.f32 %v2559, %v2683
    %v2685 = vrcp.pop %v2614
    %v2686 = vmul.f32 %v2561, %v2685
    %v2687 = vrcp.pop %v2617
    %v2688 = vmul.f32 %v2563, %v2687
    %v2689 = vrcp.pop %v2620
    %v2690 = vmul.f32 %v2565, %v2689
    %v2691 = vrcp.pop %v2623
    %v2692 = vmul.f32 %v2567, %v2691
    %v2693 = vrcp.pop %v2626
    %v2694 = vmul.f32 %v2569, %v2693
    %v2695 = vrcp.pop %v2629
    %v2696 = vmul.f32 %v2571, %v2695
    %v2697 = vrcp.pop %v2632
    %v2698 = vmul.f32 %v2573, %v2697
    %v2699 = vrcp.pop %v2635
    %v2700 = vmul.f32 %v2575, %v2699
    %v2701 = vrcp.pop %v2638
    %v2702 = vmul.f32 %v2577, %v2701
    %v2703 = vrcp.pop %v2641
    %v2704 = vmul.f32 %v2579, %v2703
    %v2705 = vrcp.pop %v2644
    %v2706 = vmul.f32 %v2581, %v2705
    %v2707 = vrcp.pop %v2647
    %v2708 = vmul.f32 %v2583, %v2707
    %v2709 = vrcp.pop %v2650
    %v2710 = vmul.f32 %v2585, %v2709
    %v2711 = vrcp.pop %v2653
    %v2712 = vmul.f32 %v2587, %v2711
    %v2713 = vrcp.pop %v2656
    %v2714 = vmul.f32 %v2589, %v2713
    %v2715 = vrcp.pop %v2659
    %v2716 = vmul.f32 %v2591, %v2715
    %v2717 = vrcp.pop %v2662
    %v2718 = vmul.f32 %v2593, %v2717
    %v2719 = vrcp.pop %v2665
    %v2720 = vmul.f32 %v2595, %v2719
    %v2721 = vrcp.pop %v2668
    %v2722 = vmul.f32 %v2597, %v2721
    %v2723 = vrcp.pop %v2671
    %v2724 = vmul.f32 %v2599, %v2723
    %v2725 = vrcp.pop %v2674
    %v2726 = vmul.f32 %v2601, %v2725
    %v2727 = vrcp.pop %v2677
    %v2728 = vmul.f32 %v2603, %v2727
    %v2729 = vrcp.pop %v2680
    %v2730 = vmul.f32 %v2605, %v2729
    %2731 = vst.msk [vmem:[%s3] sm:$0xff] %vm2455, %v2682
    %2732 = vst.msk [vmem:[%s3 + $0x8] sm:$0xff] %vm2455, %v2684
    %2733 = vst.msk [vmem:[%s3 + $0x10] sm:$0xff] %vm2455, %v2686
    %2734 = vst.msk [vmem:[%s3 + $0x18] sm:$0xff] %vm2455, %v2688
    %2735 = vst.msk [vmem:[%s3 + $0x20] sm:$0xff] %vm2455, %v2690
    %2736 = vst.msk [vmem:[%s3 + $0x28] sm:$0xff] %vm2455, %v2692
    %2737 = vst.msk [vmem:[%s3 + $0x30] sm:$0xff] %vm2455, %v2694
    %2738 = vst.msk [vmem:[%s3 + $0x38] sm:$0xff] %vm2455, %v2696
    %2739 = vst.msk [vmem:[%s3 + $0x40] sm:$0xff] %vm2455, %v2698
    %2740 = vst.msk [vmem:[%s3 + $0x48] sm:$0xff] %vm2455, %v2700
    %2741 = vst.msk [vmem:[%s3 + $0x50] sm:$0xff] %vm2455, %v2702
    %2742 = vst.msk [vmem:[%s3 + $0x58] sm:$0xff] %vm2455, %v2704
    %2743 = vst.msk [vmem:[%s3 + $0x60] sm:$0xff] %vm2455, %v2706
    %2744 = vst.msk [vmem:[%s3 + $0x68] sm:$0xff] %vm2455, %v2708
    %2745 = vst.msk [vmem:[%s3 + $0x70] sm:$0xff] %vm2455, %v2710
    %2746 = vst.msk [vmem:[%s3 + $0x78] sm:$0xff] %vm2455, %v2712
    %2747 = vst.msk [vmem:[%s3 + $0x80] sm:$0xff] %vm2455, %v2714
    %2748 = vst.msk [vmem:[%s3 + $0x88] sm:$0xff] %vm2455, %v2716
    %2749 = vst.msk [vmem:[%s3 + $0x90] sm:$0xff] %vm2455, %v2718
    %2750 = vst.msk [vmem:[%s3 + $0x98] sm:$0xff] %vm2455, %v2720
    %2751 = vst.msk [vmem:[%s3 + $0xa0] sm:$0xff] %vm2455, %v2722
    %2752 = vst.msk [vmem:[%s3 + $0xa8] sm:$0xff] %vm2455, %v2724
    %2753 = vst.msk [vmem:[%s3 + $0xb0] sm:$0xff] %vm2455, %v2726
    %2754 = vst.msk [vmem:[%s3 + $0xb8] sm:$0xff] %vm2455, %v2728
    %2755 = vst.msk [vmem:[%s3 + $0xc0] sm:$0xff] %vm2455, %v2730
    // Predicated region
    $region22: #{tpu_custom_call.1} parent=1 // pred_check
      _
    $region23: #{tpu_custom_call.1} parent=1 // pred_check_branch
      %2757 = sbr.rel (0) target = $region25
    $region24: #{tpu_custom_call.1} parent=1 // pred_region
      _
    $region25: #{tpu_custom_call.1} parent=1 // pred_fallthru
      _
    // Predicated region
    $region26: #{tpu_custom_call.1} parent=1 // pred_check
      _
    $region27: #{tpu_custom_call.1} parent=1 // pred_check_branch
      %2759 = sbr.rel (0) target = $region29
    $region28: #{tpu_custom_call.1} parent=1 // pred_region
      _
    $region29: #{tpu_custom_call.1} parent=1 // pred_fallthru
      _
    %2760 = vsyncpa [#allocation3], 1
    %2761 = vsyncpa [#allocation5], 1

</llo_original>
